<compile_context>
chip_gen: v7x
topology: tpu7x:2x2x1
jax: 0.10.0
libtpu: 0.0.40
codegen_flags: <defaults>
</compile_context>

<pallas_src>
import functools

import jax
import jax.numpy as jnp
from jax.experimental import pallas as pl
from jax.experimental.pallas import tpu as pltpu


_TAPS = tuple((dy, dx) for dy in (-1, 0, 1) for dx in (-1, 0, 1))
_ZROWS = 16   # 9 tap-validity rows + 1 ones row (b1) + 6 zero rows (sublane pad)


def _round_up8(n):
    return ((n + 7) // 8) * 8


# ----------------------------------------------------------------------------
# Fused whole-chain kernel.
# refs layout (per grid step g over lane groups of L = n_per*HW lanes):
#   x_ref      : (Cp0, L)             stage-0 input channels (zero padded)
#   tapm_ref   : (9, L)               per-tap validity masks (tiled per image)
#   zmask_ref  : (16*n_per, L)        block-diag [tap masks; ones; 0] per image
#   per stage i:
#     w1_ref   : (Hp, 9*Cp_i)         conv1 im2col weights
#     zc_ref   : (1, Hp, 16*n_per)    per-image z fold (+ b1 in column 9)
#     w2b_ref  : (Cop_i, 9*Hp + 8)    conv2 im2col weights (+ b2 in column 9*Hp)
#   per stage i:
#     out_ref  : (Cop_i, L)           tanh output (channel-padded, pad rows = 0)
#   scratch:
#     slab1_ref: (9*max_Cp, L)        conv1 im2col slab
#     slab2_ref: (9*max_Hp + 8, L)    conv2 im2col slab (+ bias rows)
# ----------------------------------------------------------------------------
def _chain_kernel(*refs, W, HW, n_per, stage_meta):
    n_stages = len(stage_meta)
    x_ref, tapm_ref, zmask_ref = refs[0], refs[1], refs[2]
    stage_refs = [refs[3 + 3 * i: 6 + 3 * i] for i in range(n_stages)]
    out_refs = refs[3 + 3 * n_stages: 3 + 4 * n_stages]
    slab1_ref = refs[3 + 4 * n_stages]
    slab2_ref = refs[4 + 4 * n_stages]

    L = n_per * HW
    tapm = tapm_ref[...]                                   # (9, L)
    zmasks = zmask_ref[...]                                # (16*n_per, L)
    # ones row (+7 zero rows) used to fold b2 into the conv2 matmul
    bias_rows = (jax.lax.broadcasted_iota(jnp.int32, (8, L), 0) == 0
                 ).astype(jnp.float32)

    def fill_taps(slab_ref, inp, c):
        # slab rows [t*c:(t+1)*c] = mask_t * shift_t(inp); wrapped lanes (image
        # boundary / lane-group boundary) are killed by the mask.
        for t, (dy, dx) in enumerate(_TAPS):
            s = dy * W + dx
            shifted = inp if s == 0 else pltpu.roll(inp, (-s) % L, 1)
            slab_ref[t * c:(t + 1) * c, :] = shifted * tapm[t:t + 1, :]

    inp = x_ref[...]                                       # (Cp0, L)
    for i, (cp, hp) in enumerate(stage_meta):
        w1_ref, zc_ref, w2b_ref = stage_refs[i]

        # ---- conv1: one K=9*cp dot + one tiny K=16*n_per dot (z + b1), ReLU --
        fill_taps(slab1_ref, inp, cp)
        acc1 = jnp.dot(w1_ref[...], slab1_ref[0:9 * cp, :],
                       preferred_element_type=jnp.float32)
        acc1 = acc1 + jnp.dot(zc_ref[0], zmasks,
                              preferred_element_type=jnp.float32)
        h = jnp.maximum(acc1, 0.0)                         # (hp, L)

        # ---- conv2: one K=9*hp+8 dot (b2 folded via ones row), tanh ----------
        fill_taps(slab2_ref, h, hp)
        slab2_ref[9 * hp:9 * hp + 8, :] = bias_rows
        out_full = jnp.tanh(jnp.dot(w2b_ref[...], slab2_ref[0:9 * hp + 8, :],
                                    preferred_element_type=jnp.float32))
        out_refs[i][...] = out_full.astype(out_refs[i].dtype)
        inp = out_full                                     # padded rows are 0


# ----------------------------------------------------------------------------
# Parameter-only preprocessing (hoisted out of the per-forward path).
# ----------------------------------------------------------------------------
def prepare_params(stage_params, input_dim, nz):
    prepared = []
    for i, p in enumerate(stage_params):
        cin, cout = input_dim[i], input_dim[i + 1]
        w1, b1, w2, b2 = p["w1"], p["b1"], p["w2"], p["b2"]
        hidden = w1.shape[-1]
        cp, hp, cop = _round_up8(cin), _round_up8(hidden), _round_up8(cout)

        # conv1 im2col weight (hp, 9*cp): tap-major column blocks, (out,in)
        w1r = w1.reshape(9, cin + nz, hidden)
        w1x = jnp.transpose(w1r[:, :cin, :], (0, 2, 1))        # (9, hidden, cin)
        w1x = jnp.pad(w1x, ((0, 0), (0, hp - hidden), (0, cp - cin)))
        w1_mat = jnp.transpose(w1x, (1, 0, 2)).reshape(hp, 9 * cp)

        # z branch of conv1 (spatially constant) + padded b1
        w1z = jnp.pad(w1r[:, cin:, :], ((0, 0), (0, 0), (0, hp - hidden)))
        b1p = jnp.pad(b1, (0, hp - hidden))

        # conv2 im2col weight with b2 folded: (cop, 9*hp + 8)
        w2r = jnp.transpose(w2.reshape(9, hidden, cout), (0, 2, 1))  # (9,cout,hid)
        w2r = jnp.pad(w2r, ((0, 0), (0, cop - cout), (0, hp - hidden)))
        w2_mat = jnp.transpose(w2r, (1, 0, 2)).reshape(cop, 9 * hp)
        b2p = jnp.pad(b2, (0, cop - cout))
        bias_cols = jnp.concatenate(
            [b2p[:, None], jnp.zeros((cop, 7), jnp.float32)], axis=1)
        w2b = jnp.concatenate([w2_mat, bias_cols], axis=1)

        prepared.append({"w1_mat": w1_mat, "w1z": w1z, "b1": b1p, "w2b": w2b})
    return prepared


# ----------------------------------------------------------------------------
# ArtEditing.test_forward: the whole stage chain in one pallas_call.
#   img0: (N, C0, H, W) f32; zs: list of (N, nz). Returns list of NCHW outputs.
# ----------------------------------------------------------------------------
def art_editing_test_forward(prepared, img0, zs, *, input_dim, num_groups=None):
    N, C0, H, W = img0.shape
    HW = H * W
    n_stages = len(prepared)

    hps = [int(p["w1_mat"].shape[0]) for p in prepared]
    cps = [int(p["w1_mat"].shape[1]) // 9 for p in prepared]
    cops = [int(p["w2b"].shape[0]) for p in prepared]
    couts = [int(input_dim[i + 1]) for i in range(n_stages)]
    cp0 = cps[0]

    # Lane-group grid: 2 "parallel" steps feed both v7x TensorCores; on the
    # single-core v5e/v6e the extra step costs ~0.35us (negligible).
    if num_groups is None:
        num_groups = 2 if (N % 2 == 0 and ((N // 2) * HW) % 128 == 0) else 1
    assert N % num_groups == 0
    n_per = N // num_groups
    L = n_per * HW
    assert L % 128 == 0, "lane block must be a multiple of 128"

    # stage-0 input as a lane-dense (Cp0, N*HW) slab (image-major lanes)
    x = jnp.transpose(img0, (1, 0, 2, 3)).reshape(C0, N * HW)
    x = jnp.pad(x, ((0, cp0 - C0), (0, 0)))

    # masks (shape-only -> constant-folded by XLA)
    yy = jnp.arange(H)[:, None]
    xx = jnp.arange(W)[None, :]
    tap_valid = jnp.stack([
        (((yy + dy) >= 0) & ((yy + dy) < H) &
         ((xx + dx) >= 0) & ((xx + dx) < W)).astype(jnp.float32).reshape(HW)
        for (dy, dx) in _TAPS])                                  # (9, HW)
    masks16 = jnp.concatenate(
        [tap_valid, jnp.ones((1, HW), jnp.float32),
         jnp.zeros((_ZROWS - 10, HW), jnp.float32)], axis=0)     # (16, HW)
    tapmasks = jnp.tile(tap_valid, (1, n_per))                   # (9, L)
    zmasks = jnp.kron(jnp.eye(n_per, dtype=jnp.float32), masks16)  # (16*n_per, L)

    # per-stage z fold (tiny): zc[n, h, t] = sum_z z[n,z]*w1z[t,z,h]; col 9 = b1
    zcs = []
    for i in range(n_stages):
        hp = hps[i]
        zc = jnp.einsum("nz,tzh->nht", zs[i], prepared[i]["w1z"])   # (N, hp, 9)
        zc = jnp.concatenate(
            [zc,
             jnp.broadcast_to(prepared[i]["b1"][None, :, None], (N, hp, 1)),
             jnp.zeros((N, hp, _ZROWS - 10), jnp.float32)], axis=-1)  # (N,hp,16)
        zc = zc.reshape(num_groups, n_per, hp, _ZROWS)
        zc = jnp.transpose(zc, (0, 2, 1, 3)).reshape(num_groups, hp,
                                                     n_per * _ZROWS)
        zcs.append(zc)

    inputs = [x, tapmasks, zmasks]
    in_specs = [
        pl.BlockSpec((cp0, L), lambda g: (0, g)),
        pl.BlockSpec((9, L), lambda g: (0, 0)),
        pl.BlockSpec((_ZROWS * n_per, L), lambda g: (0, 0)),
    ]
    for i in range(n_stages):
        inputs += [prepared[i]["w1_mat"], zcs[i], prepared[i]["w2b"]]
        in_specs += [
            pl.BlockSpec((hps[i], 9 * cps[i]), lambda g: (0, 0)),
            pl.BlockSpec((1, hps[i], _ZROWS * n_per), lambda g: (g, 0, 0)),
            pl.BlockSpec((cops[i], 9 * hps[i] + 8), lambda g: (0, 0)),
        ]

    out_shape = tuple(jax.ShapeDtypeStruct((cop, N * HW), jnp.float32)
                      for cop in cops)
    out_specs = tuple(pl.BlockSpec((cop, L), lambda g: (0, g)) for cop in cops)

    scratch_shapes = [
        pltpu.VMEM((9 * max(cps), L), jnp.float32),
        pltpu.VMEM((9 * max(hps) + 8, L), jnp.float32),
    ]

    kernel = functools.partial(
        _chain_kernel, W=W, HW=HW, n_per=n_per,
        stage_meta=tuple((cps[i], hps[i]) for i in range(n_stages)))

    outs = pl.pallas_call(
        kernel,
        out_shape=out_shape,
        grid=(num_groups,),
        in_specs=in_specs,
        out_specs=out_specs,
        scratch_shapes=scratch_shapes,
        compiler_params=pltpu.CompilerParams(
            dimension_semantics=("parallel",)),
    )(*inputs)

    # back to NCHW (drop channel padding); XLA fuses slice+reshape+transpose
    outs_nchw = []
    for o, cout in zip(outs, couts):
        o = o[:cout].reshape(cout, N, H, W)
        outs_nchw.append(jnp.transpose(o, (1, 0, 2, 3)))
    return outs_nchw


# ----------------------------------------------------------------------------
# Pure-JAX reference (XLA conv) of the same math, for numerical verification
# ----------------------------------------------------------------------------
def _ref_netG(params, x_nchw, z):
    N, _, H, W = x_nchw.shape
    nz = z.shape[-1]
    zmap = jnp.broadcast_to(z[:, :, None, None], (N, nz, H, W))
    xin = jnp.concatenate([x_nchw, zmap], axis=1)

    def conv(x, w, b):
        y = jax.lax.conv_general_dilated(
            x, w, window_strides=(1, 1), padding="SAME",
            dimension_numbers=("NCHW", "HWIO", "NCHW"),
            precision=jax.lax.Precision.HIGHEST)
        return y + b[None, :, None, None]

    h = jnp.maximum(conv(xin, params["w1"], params["b1"]), 0.0)
    return jnp.tanh(conv(h, params["w2"], params["b2"]))


# ----------------------------------------------------------------------------
# Deterministic parameter construction (synthetic "checkpoint")
# ----------------------------------------------------------------------------
def make_params(key, input_dim, nz, hidden):
    n_stage = len(input_dim)
    stage_params = []
    for i in range(n_stage - 1):
        cin, cout = input_dim[i], input_dim[i + 1]
        k1, k2, k3, k4, key = jax.random.split(key, 5)
        stage_params.append({
            "w1": 0.1 * jax.random.normal(k1, (3, 3, cin + nz, hidden),
                                          dtype=jnp.float32),
            "b1": 0.1 * jax.random.normal(k2, (hidden,), dtype=jnp.float32),
            "w2": 0.1 * jax.random.normal(k3, (3, 3, hidden, cout),
                                          dtype=jnp.float32),
            "b2": 0.1 * jax.random.normal(k4, (cout,), dtype=jnp.float32),
        })
    return stage_params


if __name__ == "__main__":
    # Small synthetic config mirroring ArtEditing opts:
    #   n_stage = 3, input_dim = [1, 4, 3] (sketch -> flat -> artwork), nz = 4
    n_stage = 3
    input_dim = [1, 4, 3]
    nz = 4
    hidden = 8
    N, H, W = 2, 16, 16

    key = jax.random.PRNGKey(0)
    kp, kx, kz = jax.random.split(key, 3)

    stage_params = make_params(kp, input_dim, nz, hidden)
    img0 = jax.random.normal(kx, (N, input_dim[0], H, W), dtype=jnp.float32)
    zkeys = jax.random.split(kz, n_stage - 1)
    zs = [jax.random.normal(zkeys[i], (N, nz), dtype=jnp.float32)
          for i in range(n_stage - 1)]

    # parameter prep hoisted out of the forward path (done once)
    prepared = prepare_params(stage_params, input_dim, nz)

    fwd = jax.jit(functools.partial(art_editing_test_forward,
                                    input_dim=tuple(input_dim)))
    outs = fwd(prepared, img0, zs)
    outs = [jax.block_until_ready(o) for o in outs]

    # reference chain (pure JAX / XLA) for correctness
    ref_outs = []
    ref_inp = img0
    for i, p in enumerate(stage_params):
        r = _ref_netG(p, ref_inp, zs[i])
        ref_outs.append(r)
        ref_inp = r

    assert len(outs) == n_stage - 1
    for i, (o, r) in enumerate(zip(outs, ref_outs)):
        assert o.shape == (N, input_dim[i + 1], H, W), o.shape
        assert bool(jnp.all(jnp.isfinite(o)))
        err = float(jnp.max(jnp.abs(o - r)))
        # guards tap order / shift direction / halo masks / z+b1 fold / b2 fold;
        # observed error is ~1e-6, tolerance left loose for MXU precision modes.
        assert err < 1e-2, f"stage {i} max abs err {err}"

    print("KERNEL_OK")
</pallas_src>

<mosaic_0001>
module attributes {stable_mosaic.version = 11 : i64} {
  func.func @_chain_kernel(%arg0: i32, %arg1: memref<8x256xf32, #tpu.memory_space<vmem>>, %arg2: memref<9x256xf32, #tpu.memory_space<vmem>>, %arg3: memref<16x256xf32, #tpu.memory_space<vmem>>, %arg4: memref<8x72xf32, #tpu.memory_space<vmem>>, %arg5: memref<1x8x16xf32, #tpu.memory_space<vmem>>, %arg6: memref<8x80xf32, #tpu.memory_space<vmem>>, %arg7: memref<8x72xf32, #tpu.memory_space<vmem>>, %arg8: memref<1x8x16xf32, #tpu.memory_space<vmem>>, %arg9: memref<8x80xf32, #tpu.memory_space<vmem>>, %arg10: memref<8x256xf32, #tpu.memory_space<vmem>>, %arg11: memref<8x256xf32, #tpu.memory_space<vmem>>, %arg12: memref<72x256xf32, #tpu.memory_space<vmem>>, %arg13: memref<80x256xf32, #tpu.memory_space<vmem>>) attributes {dimension_semantics = [#tpu.dimension_semantics<parallel>], iteration_bounds = array<i64: 2>, scalar_prefetch = 0 : i64, scratch_operands = 2 : i64, tpu.core_type = #tpu.core_type<tc>, window_params = [{transform_indices = @transform_0, window_bounds = array<i64: 8, 256>}, {pipeline_mode = #tpu.pipeline_mode<synchronous>, transform_indices = @transform_1, window_bounds = array<i64: 9, 256>}, {pipeline_mode = #tpu.pipeline_mode<synchronous>, transform_indices = @transform_2, window_bounds = array<i64: 16, 256>}, {pipeline_mode = #tpu.pipeline_mode<synchronous>, transform_indices = @transform_3, window_bounds = array<i64: 8, 72>}, {transform_indices = @transform_4, window_bounds = array<i64: 1, 8, 16>}, {pipeline_mode = #tpu.pipeline_mode<synchronous>, transform_indices = @transform_5, window_bounds = array<i64: 8, 80>}, {pipeline_mode = #tpu.pipeline_mode<synchronous>, transform_indices = @transform_6, window_bounds = array<i64: 8, 72>}, {transform_indices = @transform_7, window_bounds = array<i64: 1, 8, 16>}, {pipeline_mode = #tpu.pipeline_mode<synchronous>, transform_indices = @transform_8, window_bounds = array<i64: 8, 80>}, {transform_indices = @transform_9, window_bounds = array<i64: 8, 256>}, {transform_indices = @transform_10, window_bounds = array<i64: 8, 256>}]} {
    %c0 = arith.constant 0 : index
    %c0_0 = arith.constant 0 : index
    %0 = vector.load %arg2[%c0, %c0_0] : memref<9x256xf32, #tpu.memory_space<vmem>>, vector<9x256xf32>
    %c0_1 = arith.constant 0 : index
    %c0_2 = arith.constant 0 : index
    %1 = vector.load %arg3[%c0_1, %c0_2] : memref<16x256xf32, #tpu.memory_space<vmem>>, vector<16x256xf32>
    %2 = tpu.iota {dimensions = array<i32: 0>} : vector<8x256xi32>
    %c0_i32 = arith.constant 0 : i32
    %3 = vector.broadcast %c0_i32 : i32 to vector<8x256xi32>
    %4 = arith.cmpi eq, %2, %3 : vector<8x256xi32>
    %5 = arith.extui %4 : vector<8x256xi1> to vector<8x256xi32>
    %6 = arith.sitofp %5 : vector<8x256xi32> to vector<8x256xf32>
    %c0_3 = arith.constant 0 : index
    %c0_4 = arith.constant 0 : index
    %7 = vector.load %arg1[%c0_3, %c0_4] : memref<8x256xf32, #tpu.memory_space<vmem>>, vector<8x256xf32>
    %c17_i32 = arith.constant 17 : i32
    %8 = tpu.dynamic_rotate %7 by %c17_i32 dim 1 : vector<8x256xf32>, i32 -> vector<8x256xf32>
    %9 = vector.extract_strided_slice %0 {offsets = [0, 0], sizes = [1, 256], strides = [1, 1]} : vector<9x256xf32> to vector<1x256xf32>
    %10 = vector.broadcast %9 : vector<1x256xf32> to vector<8x256xf32>
    %11 = arith.mulf %8, %10 : vector<8x256xf32>
    %c0_5 = arith.constant 0 : index
    %c0_6 = arith.constant 0 : index
    %12 = vector.load %arg12[%c0_5, %c0_6] : memref<72x256xf32, #tpu.memory_space<vmem>>, vector<8x256xf32>
    tpu.vector_store %arg12[%c0_5, %c0_6], %11 {strides = array<i32>} : memref<72x256xf32, #tpu.memory_space<vmem>>, vector<8x256xf32>,
    %c16_i32 = arith.constant 16 : i32
    %13 = tpu.dynamic_rotate %7 by %c16_i32 dim 1 : vector<8x256xf32>, i32 -> vector<8x256xf32>
    %14 = vector.extract_strided_slice %0 {offsets = [1, 0], sizes = [1, 256], strides = [1, 1]} : vector<9x256xf32> to vector<1x256xf32>
    %15 = vector.broadcast %14 : vector<1x256xf32> to vector<8x256xf32>
    %16 = arith.mulf %13, %15 : vector<8x256xf32>
    %c8 = arith.constant 8 : index
    %c0_7 = arith.constant 0 : index
    %17 = vector.load %arg12[%c8, %c0_7] : memref<72x256xf32, #tpu.memory_space<vmem>>, vector<8x256xf32>
    tpu.vector_store %arg12[%c8, %c0_7], %16 {strides = array<i32>} : memref<72x256xf32, #tpu.memory_space<vmem>>, vector<8x256xf32>,
    %c15_i32 = arith.constant 15 : i32
    %18 = tpu.dynamic_rotate %7 by %c15_i32 dim 1 : vector<8x256xf32>, i32 -> vector<8x256xf32>
    %19 = vector.extract_strided_slice %0 {offsets = [2, 0], sizes = [1, 256], strides = [1, 1]} : vector<9x256xf32> to vector<1x256xf32>
    %20 = vector.broadcast %19 : vector<1x256xf32> to vector<8x256xf32>
    %21 = arith.mulf %18, %20 : vector<8x256xf32>
    %c16 = arith.constant 16 : index
    %c0_8 = arith.constant 0 : index
    %22 = vector.load %arg12[%c16, %c0_8] : memref<72x256xf32, #tpu.memory_space<vmem>>, vector<8x256xf32>
    tpu.vector_store %arg12[%c16, %c0_8], %21 {strides = array<i32>} : memref<72x256xf32, #tpu.memory_space<vmem>>, vector<8x256xf32>,
    %c1_i32 = arith.constant 1 : i32
    %23 = tpu.dynamic_rotate %7 by %c1_i32 dim 1 : vector<8x256xf32>, i32 -> vector<8x256xf32>
    %24 = vector.extract_strided_slice %0 {offsets = [3, 0], sizes = [1, 256], strides = [1, 1]} : vector<9x256xf32> to vector<1x256xf32>
    %25 = vector.broadcast %24 : vector<1x256xf32> to vector<8x256xf32>
    %26 = arith.mulf %23, %25 : vector<8x256xf32>
    %c24 = arith.constant 24 : index
    %c0_9 = arith.constant 0 : index
    %27 = vector.load %arg12[%c24, %c0_9] : memref<72x256xf32, #tpu.memory_space<vmem>>, vector<8x256xf32>
    tpu.vector_store %arg12[%c24, %c0_9], %26 {strides = array<i32>} : memref<72x256xf32, #tpu.memory_space<vmem>>, vector<8x256xf32>,
    %28 = vector.extract_strided_slice %0 {offsets = [4, 0], sizes = [1, 256], strides = [1, 1]} : vector<9x256xf32> to vector<1x256xf32>
    %29 = vector.broadcast %28 : vector<1x256xf32> to vector<8x256xf32>
    %30 = arith.mulf %7, %29 : vector<8x256xf32>
    %c32 = arith.constant 32 : index
    %c0_10 = arith.constant 0 : index
    %31 = vector.load %arg12[%c32, %c0_10] : memref<72x256xf32, #tpu.memory_space<vmem>>, vector<8x256xf32>
    tpu.vector_store %arg12[%c32, %c0_10], %30 {strides = array<i32>} : memref<72x256xf32, #tpu.memory_space<vmem>>, vector<8x256xf32>,
    %c255_i32 = arith.constant 255 : i32
    %32 = tpu.dynamic_rotate %7 by %c255_i32 dim 1 : vector<8x256xf32>, i32 -> vector<8x256xf32>
    %33 = vector.extract_strided_slice %0 {offsets = [5, 0], sizes = [1, 256], strides = [1, 1]} : vector<9x256xf32> to vector<1x256xf32>
    %34 = vector.broadcast %33 : vector<1x256xf32> to vector<8x256xf32>
    %35 = arith.mulf %32, %34 : vector<8x256xf32>
    %c40 = arith.constant 40 : index
    %c0_11 = arith.constant 0 : index
    %36 = vector.load %arg12[%c40, %c0_11] : memref<72x256xf32, #tpu.memory_space<vmem>>, vector<8x256xf32>
    tpu.vector_store %arg12[%c40, %c0_11], %35 {strides = array<i32>} : memref<72x256xf32, #tpu.memory_space<vmem>>, vector<8x256xf32>,
    %c241_i32 = arith.constant 241 : i32
    %37 = tpu.dynamic_rotate %7 by %c241_i32 dim 1 : vector<8x256xf32>, i32 -> vector<8x256xf32>
    %38 = vector.extract_strided_slice %0 {offsets = [6, 0], sizes = [1, 256], strides = [1, 1]} : vector<9x256xf32> to vector<1x256xf32>
    %39 = vector.broadcast %38 : vector<1x256xf32> to vector<8x256xf32>
    %40 = arith.mulf %37, %39 : vector<8x256xf32>
    %c48 = arith.constant 48 : index
    %c0_12 = arith.constant 0 : index
    %41 = vector.load %arg12[%c48, %c0_12] : memref<72x256xf32, #tpu.memory_space<vmem>>, vector<8x256xf32>
    tpu.vector_store %arg12[%c48, %c0_12], %40 {strides = array<i32>} : memref<72x256xf32, #tpu.memory_space<vmem>>, vector<8x256xf32>,
    %c240_i32 = arith.constant 240 : i32
    %42 = tpu.dynamic_rotate %7 by %c240_i32 dim 1 : vector<8x256xf32>, i32 -> vector<8x256xf32>
    %43 = vector.extract_strided_slice %0 {offsets = [7, 0], sizes = [1, 256], strides = [1, 1]} : vector<9x256xf32> to vector<1x256xf32>
    %44 = vector.broadcast %43 : vector<1x256xf32> to vector<8x256xf32>
    %45 = arith.mulf %42, %44 : vector<8x256xf32>
    %c56 = arith.constant 56 : index
    %c0_13 = arith.constant 0 : index
    %46 = vector.load %arg12[%c56, %c0_13] : memref<72x256xf32, #tpu.memory_space<vmem>>, vector<8x256xf32>
    tpu.vector_store %arg12[%c56, %c0_13], %45 {strides = array<i32>} : memref<72x256xf32, #tpu.memory_space<vmem>>, vector<8x256xf32>,
    %c239_i32 = arith.constant 239 : i32
    %47 = tpu.dynamic_rotate %7 by %c239_i32 dim 1 : vector<8x256xf32>, i32 -> vector<8x256xf32>
    %48 = vector.extract_strided_slice %0 {offsets = [8, 0], sizes = [1, 256], strides = [1, 1]} : vector<9x256xf32> to vector<1x256xf32>
    %49 = vector.broadcast %48 : vector<1x256xf32> to vector<8x256xf32>
    %50 = arith.mulf %47, %49 : vector<8x256xf32>
    %c64 = arith.constant 64 : index
    %c0_14 = arith.constant 0 : index
    %51 = vector.load %arg12[%c64, %c0_14] : memref<72x256xf32, #tpu.memory_space<vmem>>, vector<8x256xf32>
    tpu.vector_store %arg12[%c64, %c0_14], %50 {strides = array<i32>} : memref<72x256xf32, #tpu.memory_space<vmem>>, vector<8x256xf32>,
    %c0_15 = arith.constant 0 : index
    %c0_16 = arith.constant 0 : index
    %52 = vector.load %arg4[%c0_15, %c0_16] : memref<8x72xf32, #tpu.memory_space<vmem>>, vector<8x72xf32>
    %c0_17 = arith.constant 0 : index
    %c0_18 = arith.constant 0 : index
    %53 = vector.load %arg12[%c0_17, %c0_18] : memref<72x256xf32, #tpu.memory_space<vmem>>, vector<72x256xf32>
    %cst = arith.constant dense<0.000000e+00> : vector<8x256xf32>
    %54 = tpu.matmul %52, %53, %cst {dimension_numbers = #tpu.dot_dimension_numbers<[1], [0], [0], [1], [0, 0, 1, 1], [], []>} : vector<8x72xf32>, vector<72x256xf32>, vector<8x256xf32> -> vector<8x256xf32>
    %c0_19 = arith.constant 0 : index
    %c0_20 = arith.constant 0 : index
    %c0_21 = arith.constant 0 : index
    %55 = vector.load %arg5[%c0_19, %c0_20, %c0_21] : memref<1x8x16xf32, #tpu.memory_space<vmem>>, vector<1x8x16xf32>
    %56 = vector.shape_cast %55 : vector<1x8x16xf32> to vector<8x16xf32>
    %cst_22 = arith.constant dense<0.000000e+00> : vector<8x256xf32>
    %57 = tpu.matmul %56, %1, %cst_22 {dimension_numbers = #tpu.dot_dimension_numbers<[1], [0], [0], [1], [0, 0, 1, 1], [], []>} : vector<8x16xf32>, vector<16x256xf32>, vector<8x256xf32> -> vector<8x256xf32>
    %58 = arith.addf %54, %57 : vector<8x256xf32>
    %cst_23 = arith.constant 0.000000e+00 : f32
    %59 = vector.broadcast %cst_23 : f32 to vector<8x256xf32>
    %60 = arith.maximumf %58, %59 : vector<8x256xf32>
    %c17_i32_24 = arith.constant 17 : i32
    %61 = tpu.dynamic_rotate %60 by %c17_i32_24 dim 1 : vector<8x256xf32>, i32 -> vector<8x256xf32>
    %62 = vector.extract_strided_slice %0 {offsets = [0, 0], sizes = [1, 256], strides = [1, 1]} : vector<9x256xf32> to vector<1x256xf32>
    %63 = vector.broadcast %62 : vector<1x256xf32> to vector<8x256xf32>
    %64 = arith.mulf %61, %63 : vector<8x256xf32>
    %c0_25 = arith.constant 0 : index
    %c0_26 = arith.constant 0 : index
    %65 = vector.load %arg13[%c0_25, %c0_26] : memref<80x256xf32, #tpu.memory_space<vmem>>, vector<8x256xf32>
    tpu.vector_store %arg13[%c0_25, %c0_26], %64 {strides = array<i32>} : memref<80x256xf32, #tpu.memory_space<vmem>>, vector<8x256xf32>,
    %c16_i32_27 = arith.constant 16 : i32
    %66 = tpu.dynamic_rotate %60 by %c16_i32_27 dim 1 : vector<8x256xf32>, i32 -> vector<8x256xf32>
    %67 = vector.extract_strided_slice %0 {offsets = [1, 0], sizes = [1, 256], strides = [1, 1]} : vector<9x256xf32> to vector<1x256xf32>
    %68 = vector.broadcast %67 : vector<1x256xf32> to vector<8x256xf32>
    %69 = arith.mulf %66, %68 : vector<8x256xf32>
    %c8_28 = arith.constant 8 : index
    %c0_29 = arith.constant 0 : index
    %70 = vector.load %arg13[%c8_28, %c0_29] : memref<80x256xf32, #tpu.memory_space<vmem>>, vector<8x256xf32>
    tpu.vector_store %arg13[%c8_28, %c0_29], %69 {strides = array<i32>} : memref<80x256xf32, #tpu.memory_space<vmem>>, vector<8x256xf32>,
    %c15_i32_30 = arith.constant 15 : i32
    %71 = tpu.dynamic_rotate %60 by %c15_i32_30 dim 1 : vector<8x256xf32>, i32 -> vector<8x256xf32>
    %72 = vector.extract_strided_slice %0 {offsets = [2, 0], sizes = [1, 256], strides = [1, 1]} : vector<9x256xf32> to vector<1x256xf32>
    %73 = vector.broadcast %72 : vector<1x256xf32> to vector<8x256xf32>
    %74 = arith.mulf %71, %73 : vector<8x256xf32>
    %c16_31 = arith.constant 16 : index
    %c0_32 = arith.constant 0 : index
    %75 = vector.load %arg13[%c16_31, %c0_32] : memref<80x256xf32, #tpu.memory_space<vmem>>, vector<8x256xf32>
    tpu.vector_store %arg13[%c16_31, %c0_32], %74 {strides = array<i32>} : memref<80x256xf32, #tpu.memory_space<vmem>>, vector<8x256xf32>,
    %c1_i32_33 = arith.constant 1 : i32
    %76 = tpu.dynamic_rotate %60 by %c1_i32_33 dim 1 : vector<8x256xf32>, i32 -> vector<8x256xf32>
    %77 = vector.extract_strided_slice %0 {offsets = [3, 0], sizes = [1, 256], strides = [1, 1]} : vector<9x256xf32> to vector<1x256xf32>
    %78 = vector.broadcast %77 : vector<1x256xf32> to vector<8x256xf32>
    %79 = arith.mulf %76, %78 : vector<8x256xf32>
    %c24_34 = arith.constant 24 : index
    %c0_35 = arith.constant 0 : index
    %80 = vector.load %arg13[%c24_34, %c0_35] : memref<80x256xf32, #tpu.memory_space<vmem>>, vector<8x256xf32>
    tpu.vector_store %arg13[%c24_34, %c0_35], %79 {strides = array<i32>} : memref<80x256xf32, #tpu.memory_space<vmem>>, vector<8x256xf32>,
    %81 = vector.extract_strided_slice %0 {offsets = [4, 0], sizes = [1, 256], strides = [1, 1]} : vector<9x256xf32> to vector<1x256xf32>
    %82 = vector.broadcast %81 : vector<1x256xf32> to vector<8x256xf32>
    %83 = arith.mulf %60, %82 : vector<8x256xf32>
    %c32_36 = arith.constant 32 : index
    %c0_37 = arith.constant 0 : index
    %84 = vector.load %arg13[%c32_36, %c0_37] : memref<80x256xf32, #tpu.memory_space<vmem>>, vector<8x256xf32>
    tpu.vector_store %arg13[%c32_36, %c0_37], %83 {strides = array<i32>} : memref<80x256xf32, #tpu.memory_space<vmem>>, vector<8x256xf32>,
    %c255_i32_38 = arith.constant 255 : i32
    %85 = tpu.dynamic_rotate %60 by %c255_i32_38 dim 1 : vector<8x256xf32>, i32 -> vector<8x256xf32>
    %86 = vector.extract_strided_slice %0 {offsets = [5, 0], sizes = [1, 256], strides = [1, 1]} : vector<9x256xf32> to vector<1x256xf32>
    %87 = vector.broadcast %86 : vector<1x256xf32> to vector<8x256xf32>
    %88 = arith.mulf %85, %87 : vector<8x256xf32>
    %c40_39 = arith.constant 40 : index
    %c0_40 = arith.constant 0 : index
    %89 = vector.load %arg13[%c40_39, %c0_40] : memref<80x256xf32, #tpu.memory_space<vmem>>, vector<8x256xf32>
    tpu.vector_store %arg13[%c40_39, %c0_40], %88 {strides = array<i32>} : memref<80x256xf32, #tpu.memory_space<vmem>>, vector<8x256xf32>,
    %c241_i32_41 = arith.constant 241 : i32
    %90 = tpu.dynamic_rotate %60 by %c241_i32_41 dim 1 : vector<8x256xf32>, i32 -> vector<8x256xf32>
    %91 = vector.extract_strided_slice %0 {offsets = [6, 0], sizes = [1, 256], strides = [1, 1]} : vector<9x256xf32> to vector<1x256xf32>
    %92 = vector.broadcast %91 : vector<1x256xf32> to vector<8x256xf32>
    %93 = arith.mulf %90, %92 : vector<8x256xf32>
    %c48_42 = arith.constant 48 : index
    %c0_43 = arith.constant 0 : index
    %94 = vector.load %arg13[%c48_42, %c0_43] : memref<80x256xf32, #tpu.memory_space<vmem>>, vector<8x256xf32>
    tpu.vector_store %arg13[%c48_42, %c0_43], %93 {strides = array<i32>} : memref<80x256xf32, #tpu.memory_space<vmem>>, vector<8x256xf32>,
    %c240_i32_44 = arith.constant 240 : i32
    %95 = tpu.dynamic_rotate %60 by %c240_i32_44 dim 1 : vector<8x256xf32>, i32 -> vector<8x256xf32>
    %96 = vector.extract_strided_slice %0 {offsets = [7, 0], sizes = [1, 256], strides = [1, 1]} : vector<9x256xf32> to vector<1x256xf32>
    %97 = vector.broadcast %96 : vector<1x256xf32> to vector<8x256xf32>
    %98 = arith.mulf %95, %97 : vector<8x256xf32>
    %c56_45 = arith.constant 56 : index
    %c0_46 = arith.constant 0 : index
    %99 = vector.load %arg13[%c56_45, %c0_46] : memref<80x256xf32, #tpu.memory_space<vmem>>, vector<8x256xf32>
    tpu.vector_store %arg13[%c56_45, %c0_46], %98 {strides = array<i32>} : memref<80x256xf32, #tpu.memory_space<vmem>>, vector<8x256xf32>,
    %c239_i32_47 = arith.constant 239 : i32
    %100 = tpu.dynamic_rotate %60 by %c239_i32_47 dim 1 : vector<8x256xf32>, i32 -> vector<8x256xf32>
    %101 = vector.extract_strided_slice %0 {offsets = [8, 0], sizes = [1, 256], strides = [1, 1]} : vector<9x256xf32> to vector<1x256xf32>
    %102 = vector.broadcast %101 : vector<1x256xf32> to vector<8x256xf32>
    %103 = arith.mulf %100, %102 : vector<8x256xf32>
    %c64_48 = arith.constant 64 : index
    %c0_49 = arith.constant 0 : index
    %104 = vector.load %arg13[%c64_48, %c0_49] : memref<80x256xf32, #tpu.memory_space<vmem>>, vector<8x256xf32>
    tpu.vector_store %arg13[%c64_48, %c0_49], %103 {strides = array<i32>} : memref<80x256xf32, #tpu.memory_space<vmem>>, vector<8x256xf32>,
    %c72 = arith.constant 72 : index
    %c0_50 = arith.constant 0 : index
    %105 = vector.load %arg13[%c72, %c0_50] : memref<80x256xf32, #tpu.memory_space<vmem>>, vector<8x256xf32>
    tpu.vector_store %arg13[%c72, %c0_50], %6 {strides = array<i32>} : memref<80x256xf32, #tpu.memory_space<vmem>>, vector<8x256xf32>,
    %c0_51 = arith.constant 0 : index
    %c0_52 = arith.constant 0 : index
    %106 = vector.load %arg6[%c0_51, %c0_52] : memref<8x80xf32, #tpu.memory_space<vmem>>, vector<8x80xf32>
    %c0_53 = arith.constant 0 : index
    %c0_54 = arith.constant 0 : index
    %107 = vector.load %arg13[%c0_53, %c0_54] : memref<80x256xf32, #tpu.memory_space<vmem>>, vector<80x256xf32>
    %cst_55 = arith.constant dense<0.000000e+00> : vector<8x256xf32>
    %108 = tpu.matmul %106, %107, %cst_55 {dimension_numbers = #tpu.dot_dimension_numbers<[1], [0], [0], [1], [0, 0, 1, 1], [], []>} : vector<8x80xf32>, vector<80x256xf32>, vector<8x256xf32> -> vector<8x256xf32>
    %109 = math.tanh %108 : vector<8x256xf32>
    %c0_56 = arith.constant 0 : index
    %c0_57 = arith.constant 0 : index
    %110 = vector.load %arg10[%c0_56, %c0_57] : memref<8x256xf32, #tpu.memory_space<vmem>>, vector<8x256xf32>
    tpu.vector_store %arg10[%c0_56, %c0_57], %109 {strides = array<i32>} : memref<8x256xf32, #tpu.memory_space<vmem>>, vector<8x256xf32>,
    %c17_i32_58 = arith.constant 17 : i32
    %111 = tpu.dynamic_rotate %109 by %c17_i32_58 dim 1 : vector<8x256xf32>, i32 -> vector<8x256xf32>
    %112 = vector.extract_strided_slice %0 {offsets = [0, 0], sizes = [1, 256], strides = [1, 1]} : vector<9x256xf32> to vector<1x256xf32>
    %113 = vector.broadcast %112 : vector<1x256xf32> to vector<8x256xf32>
    %114 = arith.mulf %111, %113 : vector<8x256xf32>
    %c0_59 = arith.constant 0 : index
    %c0_60 = arith.constant 0 : index
    %115 = vector.load %arg12[%c0_59, %c0_60] : memref<72x256xf32, #tpu.memory_space<vmem>>, vector<8x256xf32>
    tpu.vector_store %arg12[%c0_59, %c0_60], %114 {strides = array<i32>} : memref<72x256xf32, #tpu.memory_space<vmem>>, vector<8x256xf32>,
    %c16_i32_61 = arith.constant 16 : i32
    %116 = tpu.dynamic_rotate %109 by %c16_i32_61 dim 1 : vector<8x256xf32>, i32 -> vector<8x256xf32>
    %117 = vector.extract_strided_slice %0 {offsets = [1, 0], sizes = [1, 256], strides = [1, 1]} : vector<9x256xf32> to vector<1x256xf32>
    %118 = vector.broadcast %117 : vector<1x256xf32> to vector<8x256xf32>
    %119 = arith.mulf %116, %118 : vector<8x256xf32>
    %c8_62 = arith.constant 8 : index
    %c0_63 = arith.constant 0 : index
    %120 = vector.load %arg12[%c8_62, %c0_63] : memref<72x256xf32, #tpu.memory_space<vmem>>, vector<8x256xf32>
    tpu.vector_store %arg12[%c8_62, %c0_63], %119 {strides = array<i32>} : memref<72x256xf32, #tpu.memory_space<vmem>>, vector<8x256xf32>,
    %c15_i32_64 = arith.constant 15 : i32
    %121 = tpu.dynamic_rotate %109 by %c15_i32_64 dim 1 : vector<8x256xf32>, i32 -> vector<8x256xf32>
    %122 = vector.extract_strided_slice %0 {offsets = [2, 0], sizes = [1, 256], strides = [1, 1]} : vector<9x256xf32> to vector<1x256xf32>
    %123 = vector.broadcast %122 : vector<1x256xf32> to vector<8x256xf32>
    %124 = arith.mulf %121, %123 : vector<8x256xf32>
    %c16_65 = arith.constant 16 : index
    %c0_66 = arith.constant 0 : index
    %125 = vector.load %arg12[%c16_65, %c0_66] : memref<72x256xf32, #tpu.memory_space<vmem>>, vector<8x256xf32>
    tpu.vector_store %arg12[%c16_65, %c0_66], %124 {strides = array<i32>} : memref<72x256xf32, #tpu.memory_space<vmem>>, vector<8x256xf32>,
    %c1_i32_67 = arith.constant 1 : i32
    %126 = tpu.dynamic_rotate %109 by %c1_i32_67 dim 1 : vector<8x256xf32>, i32 -> vector<8x256xf32>
    %127 = vector.extract_strided_slice %0 {offsets = [3, 0], sizes = [1, 256], strides = [1, 1]} : vector<9x256xf32> to vector<1x256xf32>
    %128 = vector.broadcast %127 : vector<1x256xf32> to vector<8x256xf32>
    %129 = arith.mulf %126, %128 : vector<8x256xf32>
    %c24_68 = arith.constant 24 : index
    %c0_69 = arith.constant 0 : index
    %130 = vector.load %arg12[%c24_68, %c0_69] : memref<72x256xf32, #tpu.memory_space<vmem>>, vector<8x256xf32>
    tpu.vector_store %arg12[%c24_68, %c0_69], %129 {strides = array<i32>} : memref<72x256xf32, #tpu.memory_space<vmem>>, vector<8x256xf32>,
    %131 = vector.extract_strided_slice %0 {offsets = [4, 0], sizes = [1, 256], strides = [1, 1]} : vector<9x256xf32> to vector<1x256xf32>
    %132 = vector.broadcast %131 : vector<1x256xf32> to vector<8x256xf32>
    %133 = arith.mulf %109, %132 : vector<8x256xf32>
    %c32_70 = arith.constant 32 : index
    %c0_71 = arith.constant 0 : index
    %134 = vector.load %arg12[%c32_70, %c0_71] : memref<72x256xf32, #tpu.memory_space<vmem>>, vector<8x256xf32>
    tpu.vector_store %arg12[%c32_70, %c0_71], %133 {strides = array<i32>} : memref<72x256xf32, #tpu.memory_space<vmem>>, vector<8x256xf32>,
    %c255_i32_72 = arith.constant 255 : i32
    %135 = tpu.dynamic_rotate %109 by %c255_i32_72 dim 1 : vector<8x256xf32>, i32 -> vector<8x256xf32>
    %136 = vector.extract_strided_slice %0 {offsets = [5, 0], sizes = [1, 256], strides = [1, 1]} : vector<9x256xf32> to vector<1x256xf32>
    %137 = vector.broadcast %136 : vector<1x256xf32> to vector<8x256xf32>
    %138 = arith.mulf %135, %137 : vector<8x256xf32>
    %c40_73 = arith.constant 40 : index
    %c0_74 = arith.constant 0 : index
    %139 = vector.load %arg12[%c40_73, %c0_74] : memref<72x256xf32, #tpu.memory_space<vmem>>, vector<8x256xf32>
    tpu.vector_store %arg12[%c40_73, %c0_74], %138 {strides = array<i32>} : memref<72x256xf32, #tpu.memory_space<vmem>>, vector<8x256xf32>,
    %c241_i32_75 = arith.constant 241 : i32
    %140 = tpu.dynamic_rotate %109 by %c241_i32_75 dim 1 : vector<8x256xf32>, i32 -> vector<8x256xf32>
    %141 = vector.extract_strided_slice %0 {offsets = [6, 0], sizes = [1, 256], strides = [1, 1]} : vector<9x256xf32> to vector<1x256xf32>
    %142 = vector.broadcast %141 : vector<1x256xf32> to vector<8x256xf32>
    %143 = arith.mulf %140, %142 : vector<8x256xf32>
    %c48_76 = arith.constant 48 : index
    %c0_77 = arith.constant 0 : index
    %144 = vector.load %arg12[%c48_76, %c0_77] : memref<72x256xf32, #tpu.memory_space<vmem>>, vector<8x256xf32>
    tpu.vector_store %arg12[%c48_76, %c0_77], %143 {strides = array<i32>} : memref<72x256xf32, #tpu.memory_space<vmem>>, vector<8x256xf32>,
    %c240_i32_78 = arith.constant 240 : i32
    %145 = tpu.dynamic_rotate %109 by %c240_i32_78 dim 1 : vector<8x256xf32>, i32 -> vector<8x256xf32>
    %146 = vector.extract_strided_slice %0 {offsets = [7, 0], sizes = [1, 256], strides = [1, 1]} : vector<9x256xf32> to vector<1x256xf32>
    %147 = vector.broadcast %146 : vector<1x256xf32> to vector<8x256xf32>
    %148 = arith.mulf %145, %147 : vector<8x256xf32>
    %c56_79 = arith.constant 56 : index
    %c0_80 = arith.constant 0 : index
    %149 = vector.load %arg12[%c56_79, %c0_80] : memref<72x256xf32, #tpu.memory_space<vmem>>, vector<8x256xf32>
    tpu.vector_store %arg12[%c56_79, %c0_80], %148 {strides = array<i32>} : memref<72x256xf32, #tpu.memory_space<vmem>>, vector<8x256xf32>,
    %c239_i32_81 = arith.constant 239 : i32
    %150 = tpu.dynamic_rotate %109 by %c239_i32_81 dim 1 : vector<8x256xf32>, i32 -> vector<8x256xf32>
    %151 = vector.extract_strided_slice %0 {offsets = [8, 0], sizes = [1, 256], strides = [1, 1]} : vector<9x256xf32> to vector<1x256xf32>
    %152 = vector.broadcast %151 : vector<1x256xf32> to vector<8x256xf32>
    %153 = arith.mulf %150, %152 : vector<8x256xf32>
    %c64_82 = arith.constant 64 : index
    %c0_83 = arith.constant 0 : index
    %154 = vector.load %arg12[%c64_82, %c0_83] : memref<72x256xf32, #tpu.memory_space<vmem>>, vector<8x256xf32>
    tpu.vector_store %arg12[%c64_82, %c0_83], %153 {strides = array<i32>} : memref<72x256xf32, #tpu.memory_space<vmem>>, vector<8x256xf32>,
    %c0_84 = arith.constant 0 : index
    %c0_85 = arith.constant 0 : index
    %155 = vector.load %arg7[%c0_84, %c0_85] : memref<8x72xf32, #tpu.memory_space<vmem>>, vector<8x72xf32>
    %c0_86 = arith.constant 0 : index
    %c0_87 = arith.constant 0 : index
    %156 = vector.load %arg12[%c0_86, %c0_87] : memref<72x256xf32, #tpu.memory_space<vmem>>, vector<72x256xf32>
    %cst_88 = arith.constant dense<0.000000e+00> : vector<8x256xf32>
    %157 = tpu.matmul %155, %156, %cst_88 {dimension_numbers = #tpu.dot_dimension_numbers<[1], [0], [0], [1], [0, 0, 1, 1], [], []>} : vector<8x72xf32>, vector<72x256xf32>, vector<8x256xf32> -> vector<8x256xf32>
    %c0_89 = arith.constant 0 : index
    %c0_90 = arith.constant 0 : index
    %c0_91 = arith.constant 0 : index
    %158 = vector.load %arg8[%c0_89, %c0_90, %c0_91] : memref<1x8x16xf32, #tpu.memory_space<vmem>>, vector<1x8x16xf32>
    %159 = vector.shape_cast %158 : vector<1x8x16xf32> to vector<8x16xf32>
    %cst_92 = arith.constant dense<0.000000e+00> : vector<8x256xf32>
    %160 = tpu.matmul %159, %1, %cst_92 {dimension_numbers = #tpu.dot_dimension_numbers<[1], [0], [0], [1], [0, 0, 1, 1], [], []>} : vector<8x16xf32>, vector<16x256xf32>, vector<8x256xf32> -> vector<8x256xf32>
    %161 = arith.addf %157, %160 : vector<8x256xf32>
    %cst_93 = arith.constant 0.000000e+00 : f32
    %162 = vector.broadcast %cst_93 : f32 to vector<8x256xf32>
    %163 = arith.maximumf %161, %162 : vector<8x256xf32>
    %c17_i32_94 = arith.constant 17 : i32
    %164 = tpu.dynamic_rotate %163 by %c17_i32_94 dim 1 : vector<8x256xf32>, i32 -> vector<8x256xf32>
    %165 = vector.extract_strided_slice %0 {offsets = [0, 0], sizes = [1, 256], strides = [1, 1]} : vector<9x256xf32> to vector<1x256xf32>
    %166 = vector.broadcast %165 : vector<1x256xf32> to vector<8x256xf32>
    %167 = arith.mulf %164, %166 : vector<8x256xf32>
    %c0_95 = arith.constant 0 : index
    %c0_96 = arith.constant 0 : index
    %168 = vector.load %arg13[%c0_95, %c0_96] : memref<80x256xf32, #tpu.memory_space<vmem>>, vector<8x256xf32>
    tpu.vector_store %arg13[%c0_95, %c0_96], %167 {strides = array<i32>} : memref<80x256xf32, #tpu.memory_space<vmem>>, vector<8x256xf32>,
    %c16_i32_97 = arith.constant 16 : i32
    %169 = tpu.dynamic_rotate %163 by %c16_i32_97 dim 1 : vector<8x256xf32>, i32 -> vector<8x256xf32>
    %170 = vector.extract_strided_slice %0 {offsets = [1, 0], sizes = [1, 256], strides = [1, 1]} : vector<9x256xf32> to vector<1x256xf32>
    %171 = vector.broadcast %170 : vector<1x256xf32> to vector<8x256xf32>
    %172 = arith.mulf %169, %171 : vector<8x256xf32>
    %c8_98 = arith.constant 8 : index
    %c0_99 = arith.constant 0 : index
    %173 = vector.load %arg13[%c8_98, %c0_99] : memref<80x256xf32, #tpu.memory_space<vmem>>, vector<8x256xf32>
    tpu.vector_store %arg13[%c8_98, %c0_99], %172 {strides = array<i32>} : memref<80x256xf32, #tpu.memory_space<vmem>>, vector<8x256xf32>,
    %c15_i32_100 = arith.constant 15 : i32
    %174 = tpu.dynamic_rotate %163 by %c15_i32_100 dim 1 : vector<8x256xf32>, i32 -> vector<8x256xf32>
    %175 = vector.extract_strided_slice %0 {offsets = [2, 0], sizes = [1, 256], strides = [1, 1]} : vector<9x256xf32> to vector<1x256xf32>
    %176 = vector.broadcast %175 : vector<1x256xf32> to vector<8x256xf32>
    %177 = arith.mulf %174, %176 : vector<8x256xf32>
    %c16_101 = arith.constant 16 : index
    %c0_102 = arith.constant 0 : index
    %178 = vector.load %arg13[%c16_101, %c0_102] : memref<80x256xf32, #tpu.memory_space<vmem>>, vector<8x256xf32>
    tpu.vector_store %arg13[%c16_101, %c0_102], %177 {strides = array<i32>} : memref<80x256xf32, #tpu.memory_space<vmem>>, vector<8x256xf32>,
    %c1_i32_103 = arith.constant 1 : i32
    %179 = tpu.dynamic_rotate %163 by %c1_i32_103 dim 1 : vector<8x256xf32>, i32 -> vector<8x256xf32>
    %180 = vector.extract_strided_slice %0 {offsets = [3, 0], sizes = [1, 256], strides = [1, 1]} : vector<9x256xf32> to vector<1x256xf32>
    %181 = vector.broadcast %180 : vector<1x256xf32> to vector<8x256xf32>
    %182 = arith.mulf %179, %181 : vector<8x256xf32>
    %c24_104 = arith.constant 24 : index
    %c0_105 = arith.constant 0 : index
    %183 = vector.load %arg13[%c24_104, %c0_105] : memref<80x256xf32, #tpu.memory_space<vmem>>, vector<8x256xf32>
    tpu.vector_store %arg13[%c24_104, %c0_105], %182 {strides = array<i32>} : memref<80x256xf32, #tpu.memory_space<vmem>>, vector<8x256xf32>,
    %184 = vector.extract_strided_slice %0 {offsets = [4, 0], sizes = [1, 256], strides = [1, 1]} : vector<9x256xf32> to vector<1x256xf32>
    %185 = vector.broadcast %184 : vector<1x256xf32> to vector<8x256xf32>
    %186 = arith.mulf %163, %185 : vector<8x256xf32>
    %c32_106 = arith.constant 32 : index
    %c0_107 = arith.constant 0 : index
    %187 = vector.load %arg13[%c32_106, %c0_107] : memref<80x256xf32, #tpu.memory_space<vmem>>, vector<8x256xf32>
    tpu.vector_store %arg13[%c32_106, %c0_107], %186 {strides = array<i32>} : memref<80x256xf32, #tpu.memory_space<vmem>>, vector<8x256xf32>,
    %c255_i32_108 = arith.constant 255 : i32
    %188 = tpu.dynamic_rotate %163 by %c255_i32_108 dim 1 : vector<8x256xf32>, i32 -> vector<8x256xf32>
    %189 = vector.extract_strided_slice %0 {offsets = [5, 0], sizes = [1, 256], strides = [1, 1]} : vector<9x256xf32> to vector<1x256xf32>
    %190 = vector.broadcast %189 : vector<1x256xf32> to vector<8x256xf32>
    %191 = arith.mulf %188, %190 : vector<8x256xf32>
    %c40_109 = arith.constant 40 : index
    %c0_110 = arith.constant 0 : index
    %192 = vector.load %arg13[%c40_109, %c0_110] : memref<80x256xf32, #tpu.memory_space<vmem>>, vector<8x256xf32>
    tpu.vector_store %arg13[%c40_109, %c0_110], %191 {strides = array<i32>} : memref<80x256xf32, #tpu.memory_space<vmem>>, vector<8x256xf32>,
    %c241_i32_111 = arith.constant 241 : i32
    %193 = tpu.dynamic_rotate %163 by %c241_i32_111 dim 1 : vector<8x256xf32>, i32 -> vector<8x256xf32>
    %194 = vector.extract_strided_slice %0 {offsets = [6, 0], sizes = [1, 256], strides = [1, 1]} : vector<9x256xf32> to vector<1x256xf32>
    %195 = vector.broadcast %194 : vector<1x256xf32> to vector<8x256xf32>
    %196 = arith.mulf %193, %195 : vector<8x256xf32>
    %c48_112 = arith.constant 48 : index
    %c0_113 = arith.constant 0 : index
    %197 = vector.load %arg13[%c48_112, %c0_113] : memref<80x256xf32, #tpu.memory_space<vmem>>, vector<8x256xf32>
    tpu.vector_store %arg13[%c48_112, %c0_113], %196 {strides = array<i32>} : memref<80x256xf32, #tpu.memory_space<vmem>>, vector<8x256xf32>,
    %c240_i32_114 = arith.constant 240 : i32
    %198 = tpu.dynamic_rotate %163 by %c240_i32_114 dim 1 : vector<8x256xf32>, i32 -> vector<8x256xf32>
    %199 = vector.extract_strided_slice %0 {offsets = [7, 0], sizes = [1, 256], strides = [1, 1]} : vector<9x256xf32> to vector<1x256xf32>
    %200 = vector.broadcast %199 : vector<1x256xf32> to vector<8x256xf32>
    %201 = arith.mulf %198, %200 : vector<8x256xf32>
    %c56_115 = arith.constant 56 : index
    %c0_116 = arith.constant 0 : index
    %202 = vector.load %arg13[%c56_115, %c0_116] : memref<80x256xf32, #tpu.memory_space<vmem>>, vector<8x256xf32>
    tpu.vector_store %arg13[%c56_115, %c0_116], %201 {strides = array<i32>} : memref<80x256xf32, #tpu.memory_space<vmem>>, vector<8x256xf32>,
    %c239_i32_117 = arith.constant 239 : i32
    %203 = tpu.dynamic_rotate %163 by %c239_i32_117 dim 1 : vector<8x256xf32>, i32 -> vector<8x256xf32>
    %204 = vector.extract_strided_slice %0 {offsets = [8, 0], sizes = [1, 256], strides = [1, 1]} : vector<9x256xf32> to vector<1x256xf32>
    %205 = vector.broadcast %204 : vector<1x256xf32> to vector<8x256xf32>
    %206 = arith.mulf %203, %205 : vector<8x256xf32>
    %c64_118 = arith.constant 64 : index
    %c0_119 = arith.constant 0 : index
    %207 = vector.load %arg13[%c64_118, %c0_119] : memref<80x256xf32, #tpu.memory_space<vmem>>, vector<8x256xf32>
    tpu.vector_store %arg13[%c64_118, %c0_119], %206 {strides = array<i32>} : memref<80x256xf32, #tpu.memory_space<vmem>>, vector<8x256xf32>,
    %c72_120 = arith.constant 72 : index
    %c0_121 = arith.constant 0 : index
    %208 = vector.load %arg13[%c72_120, %c0_121] : memref<80x256xf32, #tpu.memory_space<vmem>>, vector<8x256xf32>
    tpu.vector_store %arg13[%c72_120, %c0_121], %6 {strides = array<i32>} : memref<80x256xf32, #tpu.memory_space<vmem>>, vector<8x256xf32>,
    %c0_122 = arith.constant 0 : index
    %c0_123 = arith.constant 0 : index
    %209 = vector.load %arg9[%c0_122, %c0_123] : memref<8x80xf32, #tpu.memory_space<vmem>>, vector<8x80xf32>
    %c0_124 = arith.constant 0 : index
    %c0_125 = arith.constant 0 : index
    %210 = vector.load %arg13[%c0_124, %c0_125] : memref<80x256xf32, #tpu.memory_space<vmem>>, vector<80x256xf32>
    %cst_126 = arith.constant dense<0.000000e+00> : vector<8x256xf32>
    %211 = tpu.matmul %209, %210, %cst_126 {dimension_numbers = #tpu.dot_dimension_numbers<[1], [0], [0], [1], [0, 0, 1, 1], [], []>} : vector<8x80xf32>, vector<80x256xf32>, vector<8x256xf32> -> vector<8x256xf32>
    %212 = math.tanh %211 : vector<8x256xf32>
    %c0_127 = arith.constant 0 : index
    %c0_128 = arith.constant 0 : index
    %213 = vector.load %arg11[%c0_127, %c0_128] : memref<8x256xf32, #tpu.memory_space<vmem>>, vector<8x256xf32>
    tpu.vector_store %arg11[%c0_127, %c0_128], %212 {strides = array<i32>} : memref<8x256xf32, #tpu.memory_space<vmem>>, vector<8x256xf32>,
    return
  }
  func.func @transform_0(%arg0: i32) -> (i32, i32) {
    %c0_i32 = arith.constant 0 : i32
    %c0_i32_0 = arith.constant 0 : i32
    return %c0_i32, %arg0 : i32, i32
  }
  func.func @transform_1(%arg0: i32) -> (i32, i32) {
    %c0_i32 = arith.constant 0 : i32
    %c0_i32_0 = arith.constant 0 : i32
    %c0_i32_1 = arith.constant 0 : i32
    return %c0_i32, %c0_i32_0 : i32, i32
  }
  func.func @transform_2(%arg0: i32) -> (i32, i32) {
    %c0_i32 = arith.constant 0 : i32
    %c0_i32_0 = arith.constant 0 : i32
    %c0_i32_1 = arith.constant 0 : i32
    return %c0_i32, %c0_i32_0 : i32, i32
  }
  func.func @transform_3(%arg0: i32) -> (i32, i32) {
    %c0_i32 = arith.constant 0 : i32
    %c0_i32_0 = arith.constant 0 : i32
    %c0_i32_1 = arith.constant 0 : i32
    return %c0_i32, %c0_i32_0 : i32, i32
  }
  func.func @transform_4(%arg0: i32) -> (i32, i32, i32) {
    %c0_i32 = arith.constant 0 : i32
    %c0_i32_0 = arith.constant 0 : i32
    %c0_i32_1 = arith.constant 0 : i32
    return %arg0, %c0_i32, %c0_i32_0 : i32, i32, i32
  }
  func.func @transform_5(%arg0: i32) -> (i32, i32) {
    %c0_i32 = arith.constant 0 : i32
    %c0_i32_0 = arith.constant 0 : i32
    %c0_i32_1 = arith.constant 0 : i32
    return %c0_i32, %c0_i32_0 : i32, i32
  }
  func.func @transform_6(%arg0: i32) -> (i32, i32) {
    %c0_i32 = arith.constant 0 : i32
    %c0_i32_0 = arith.constant 0 : i32
    %c0_i32_1 = arith.constant 0 : i32
    return %c0_i32, %c0_i32_0 : i32, i32
  }
  func.func @transform_7(%arg0: i32) -> (i32, i32, i32) {
    %c0_i32 = arith.constant 0 : i32
    %c0_i32_0 = arith.constant 0 : i32
    %c0_i32_1 = arith.constant 0 : i32
    return %arg0, %c0_i32, %c0_i32_0 : i32, i32, i32
  }
  func.func @transform_8(%arg0: i32) -> (i32, i32) {
    %c0_i32 = arith.constant 0 : i32
    %c0_i32_0 = arith.constant 0 : i32
    %c0_i32_1 = arith.constant 0 : i32
    return %c0_i32, %c0_i32_0 : i32, i32
  }
  func.func @transform_9(%arg0: i32) -> (i32, i32) {
    %c0_i32 = arith.constant 0 : i32
    %c0_i32_0 = arith.constant 0 : i32
    return %c0_i32, %arg0 : i32, i32
  }
  func.func @transform_10(%arg0: i32) -> (i32, i32) {
    %c0_i32 = arith.constant 0 : i32
    %c0_i32_0 = arith.constant 0 : i32
    return %c0_i32, %arg0 : i32, i32
  }
}

</mosaic_0001>

<llo_original>
// kernel: art_editing_test_forward.1
$region0: #{art_editing_test_forward.1}
  #allocation0 [shape = 'u32[]', space=smem, size = 0x4, offset = 0x4, fixed_abs, tag = 'smem constant byte address 0x4 - core index']
  #allocation1 [shape = 'u32[144,128]{1,0:T(1,128)}', space=vmem, size = 0x12000, scoped, tag = 'internal scratch']
  #allocation2 [shape = 'f32[72,256]{1,0:T(8,128)}', space=vmem, size = 0x12000, scoped, tag = 'scratch operand']
  #allocation3 [shape = 'f32[80,256]{1,0:T(8,128)}', space=vmem, size = 0x14000, scoped, tag = 'scratch operand']
  %s0 = inlined_call_operand.vmem [shape: f32[8,512], index: 0, kind: input, shape index: {}]
  %s1 = inlined_call_operand.vmem [shape: f32[9,256], index: 1, kind: input, shape index: {}]
  %s2 = inlined_call_operand.vmem [shape: f32[16,256], index: 2, kind: input, shape index: {}]
  %s3 = inlined_call_operand.vmem [shape: f32[8,72], index: 3, kind: input, shape index: {}]
  %s4 = inlined_call_operand.vmem [shape: f32[2,8,16], index: 4, kind: input, shape index: {}]
  %s5 = inlined_call_operand.vmem [shape: f32[8,80], index: 5, kind: input, shape index: {}]
  %s6 = inlined_call_operand.vmem [shape: f32[8,72], index: 6, kind: input, shape index: {}]
  %s7 = inlined_call_operand.vmem [shape: f32[2,8,16], index: 7, kind: input, shape index: {}]
  %s8 = inlined_call_operand.vmem [shape: f32[8,80], index: 8, kind: input, shape index: {}]
  %s9 = inlined_call_operand.vmem [shape: f32[8,512], index: 9, kind: output, shape index: {0}]
  %s10 = inlined_call_operand.vmem [shape: f32[8,512], index: 10, kind: output, shape index: {1}]
  %11 = xla_tuple %s9, %s10
  %s12 = sld [smem:[#allocation0]]
  $region77: #{art_editing_test_forward.1} parent=0
    _
  %s14 = ssub.s32 1, %s12
  %s15 = scalar_select 0, %s14, %s12
  loop: start=0, step=1, limit=4
  $region2: #{art_editing_test_forward.1} parent=0 // loop_pre_header
    _
  $region3: #{art_editing_test_forward.1} parent=0 // loop_header
    %s17 = sphi 0, %s21
    %p18 = scmp.ge.s32.totalorder %s17, 4
    %s27 = sphi 0, %s29
    %s30 = sphi 0, %s27
    %s31 = sphi 0, %s30
    %s47 = sphi 0, %s31
    %s51 = sphi 0, %s51
    %s53 = sphi 0, %s51
    %s54 = sphi 0, %s53
    %s68 = sphi 0, %s54
    %s72 = sphi 0, %s72
    %s74 = sphi 0, %s72
    %s75 = sphi 0, %s74
    %s89 = sphi 0, %s75
    %s93 = sphi 0, %s93
    %s95 = sphi 0, %s93
    %s96 = sphi 0, %s95
    %s110 = sphi 0, %s96
    %s116 = sphi 0, %s118
    %s119 = sphi 0, %s116
    %s120 = sphi 0, %s119
    %s136 = sphi 0, %s120
    %s140 = sphi 0, %s140
    %s142 = sphi 0, %s140
    %s143 = sphi 0, %s142
    %s157 = sphi 0, %s143
    %s161 = sphi 0, %s161
    %s163 = sphi 0, %s161
    %s164 = sphi 0, %s163
    %s178 = sphi 0, %s164
    %s184 = sphi 0, %s186
    %s187 = sphi 0, %s184
    %s188 = sphi 0, %s187
    %s204 = sphi 0, %s188
    %s208 = sphi 0, %s208
    %s210 = sphi 0, %s208
    %s211 = sphi 0, %s210
    %s225 = sphi 0, %s211
    %s231 = sphi 0, %s233
    %s234 = sphi 0, %s231
    %s235 = sphi 0, %s234
    %s251 = sphi 0, %s235
    %s257 = sphi 0, %s259
    %s260 = sphi 0, %s257
    %s261 = sphi 0, %s260
    %s277 = sphi 0, %s261
  $region4: #{art_editing_test_forward.1} parent=0 // loop_header_branch
    %20 = sbr.rel (%p18) target = $region8
  $region5: #{art_editing_test_forward.1} parent=0 // loop_body
    %s22 = ssub.s32 %s17, 1
    %s23 = ssub.s32 %s17, 2
    %s24 = sadd.s32 %s17, 1
    %s25 = ssub.s32 %s17, %s24
    %p26 = scmp.eq.s32.totalorder %s25, 0
    %s28 = sadd.s32 %s27, 1
    %s29 = scalar_select %p26, %s27, %s28
    %p32 = pneg %p26
    %p33 = scmp.eq.s32.totalorder %s17, 1
    %p34 = por %p32, %p33
    %p35 = scmp.ne.s32.totalorder %s27, %s30
    %p36 = scmp.eq.s32.totalorder %s17, 0
    %p37 = por %p35, %p36
    %p38 = scmp.ne.s32.totalorder %s27, %s30
    %p39 = scmp.eq.s32.totalorder %s22, 1
    %p40 = por %p38, %p39
    %p41 = scmp.ne.s32.totalorder %s30, %s31
    %p42 = scmp.eq.s32.totalorder %s22, 0
    %p43 = por %p41, %p42
    %p44 = scmp.ne.s32.totalorder %s30, %s31
    %p45 = scmp.eq.s32.totalorder %s23, 1
    %p46 = por %p44, %p45
    %p48 = scmp.ne.s32.totalorder %s31, %s47
    %p49 = scmp.eq.s32.totalorder %s23, 0
    %p50 = por %p48, %p49
    %s52 = sadd.s32 %s51, 1
    %p55 = scmp.eq.s32.totalorder %s17, 1
    %p56 = scmp.ne.s32.totalorder %s51, %s53
    %p57 = scmp.eq.s32.totalorder %s17, 0
    %p58 = por %p56, %p57
    %p59 = scmp.ne.s32.totalorder %s51, %s53
    %p60 = scmp.eq.s32.totalorder %s22, 1
    %p61 = por %p59, %p60
    %p62 = scmp.ne.s32.totalorder %s53, %s54
    %p63 = scmp.eq.s32.totalorder %s22, 0
    %p64 = por %p62, %p63
    %p65 = scmp.ne.s32.totalorder %s53, %s54
    %p66 = scmp.eq.s32.totalorder %s23, 1
    %p67 = por %p65, %p66
    %p69 = scmp.ne.s32.totalorder %s54, %s68
    %p70 = scmp.eq.s32.totalorder %s23, 0
    %p71 = por %p69, %p70
    %s73 = sadd.s32 %s72, 1
    %p76 = scmp.eq.s32.totalorder %s17, 1
    %p77 = scmp.ne.s32.totalorder %s72, %s74
    %p78 = scmp.eq.s32.totalorder %s17, 0
    %p79 = por %p77, %p78
    %p80 = scmp.ne.s32.totalorder %s72, %s74
    %p81 = scmp.eq.s32.totalorder %s22, 1
    %p82 = por %p80, %p81
    %p83 = scmp.ne.s32.totalorder %s74, %s75
    %p84 = scmp.eq.s32.totalorder %s22, 0
    %p85 = por %p83, %p84
    %p86 = scmp.ne.s32.totalorder %s74, %s75
    %p87 = scmp.eq.s32.totalorder %s23, 1
    %p88 = por %p86, %p87
    %p90 = scmp.ne.s32.totalorder %s75, %s89
    %p91 = scmp.eq.s32.totalorder %s23, 0
    %p92 = por %p90, %p91
    %s94 = sadd.s32 %s93, 1
    %p97 = scmp.eq.s32.totalorder %s17, 1
    %p98 = scmp.ne.s32.totalorder %s93, %s95
    %p99 = scmp.eq.s32.totalorder %s17, 0
    %p100 = por %p98, %p99
    %p101 = scmp.ne.s32.totalorder %s93, %s95
    %p102 = scmp.eq.s32.totalorder %s22, 1
    %p103 = por %p101, %p102
    %p104 = scmp.ne.s32.totalorder %s95, %s96
    %p105 = scmp.eq.s32.totalorder %s22, 0
    %p106 = por %p104, %p105
    %p107 = scmp.ne.s32.totalorder %s95, %s96
    %p108 = scmp.eq.s32.totalorder %s23, 1
    %p109 = por %p107, %p108
    %p111 = scmp.ne.s32.totalorder %s96, %s110
    %p112 = scmp.eq.s32.totalorder %s23, 0
    %p113 = por %p111, %p112
    %s114 = ssub.s32 %s17, %s24
    %p115 = scmp.eq.s32.totalorder %s114, 0
    %s117 = sadd.s32 %s116, 1
    %s118 = scalar_select %p115, %s116, %s117
    %p121 = pneg %p115
    %p122 = scmp.eq.s32.totalorder %s17, 1
    %p123 = por %p121, %p122
    %p124 = scmp.ne.s32.totalorder %s116, %s119
    %p125 = scmp.eq.s32.totalorder %s17, 0
    %p126 = por %p124, %p125
    %p127 = scmp.ne.s32.totalorder %s116, %s119
    %p128 = scmp.eq.s32.totalorder %s22, 1
    %p129 = por %p127, %p128
    %p130 = scmp.ne.s32.totalorder %s119, %s120
    %p131 = scmp.eq.s32.totalorder %s22, 0
    %p132 = por %p130, %p131
    %p133 = scmp.ne.s32.totalorder %s119, %s120
    %p134 = scmp.eq.s32.totalorder %s23, 1
    %p135 = por %p133, %p134
    %p137 = scmp.ne.s32.totalorder %s120, %s136
    %p138 = scmp.eq.s32.totalorder %s23, 0
    %p139 = por %p137, %p138
    %s141 = sadd.s32 %s140, 1
    %p144 = scmp.eq.s32.totalorder %s17, 1
    %p145 = scmp.ne.s32.totalorder %s140, %s142
    %p146 = scmp.eq.s32.totalorder %s17, 0
    %p147 = por %p145, %p146
    %p148 = scmp.ne.s32.totalorder %s140, %s142
    %p149 = scmp.eq.s32.totalorder %s22, 1
    %p150 = por %p148, %p149
    %p151 = scmp.ne.s32.totalorder %s142, %s143
    %p152 = scmp.eq.s32.totalorder %s22, 0
    %p153 = por %p151, %p152
    %p154 = scmp.ne.s32.totalorder %s142, %s143
    %p155 = scmp.eq.s32.totalorder %s23, 1
    %p156 = por %p154, %p155
    %p158 = scmp.ne.s32.totalorder %s143, %s157
    %p159 = scmp.eq.s32.totalorder %s23, 0
    %p160 = por %p158, %p159
    %s162 = sadd.s32 %s161, 1
    %p165 = scmp.eq.s32.totalorder %s17, 1
    %p166 = scmp.ne.s32.totalorder %s161, %s163
    %p167 = scmp.eq.s32.totalorder %s17, 0
    %p168 = por %p166, %p167
    %p169 = scmp.ne.s32.totalorder %s161, %s163
    %p170 = scmp.eq.s32.totalorder %s22, 1
    %p171 = por %p169, %p170
    %p172 = scmp.ne.s32.totalorder %s163, %s164
    %p173 = scmp.eq.s32.totalorder %s22, 0
    %p174 = por %p172, %p173
    %p175 = scmp.ne.s32.totalorder %s163, %s164
    %p176 = scmp.eq.s32.totalorder %s23, 1
    %p177 = por %p175, %p176
    %p179 = scmp.ne.s32.totalorder %s164, %s178
    %p180 = scmp.eq.s32.totalorder %s23, 0
    %p181 = por %p179, %p180
    %s182 = ssub.s32 %s17, %s24
    %p183 = scmp.eq.s32.totalorder %s182, 0
    %s185 = sadd.s32 %s184, 1
    %s186 = scalar_select %p183, %s184, %s185
    %p189 = pneg %p183
    %p190 = scmp.eq.s32.totalorder %s17, 1
    %p191 = por %p189, %p190
    %p192 = scmp.ne.s32.totalorder %s184, %s187
    %p193 = scmp.eq.s32.totalorder %s17, 0
    %p194 = por %p192, %p193
    %p195 = scmp.ne.s32.totalorder %s184, %s187
    %p196 = scmp.eq.s32.totalorder %s22, 1
    %p197 = por %p195, %p196
    %p198 = scmp.ne.s32.totalorder %s187, %s188
    %p199 = scmp.eq.s32.totalorder %s22, 0
    %p200 = por %p198, %p199
    %p201 = scmp.ne.s32.totalorder %s187, %s188
    %p202 = scmp.eq.s32.totalorder %s23, 1
    %p203 = por %p201, %p202
    %p205 = scmp.ne.s32.totalorder %s188, %s204
    %p206 = scmp.eq.s32.totalorder %s23, 0
    %p207 = por %p205, %p206
    %s209 = sadd.s32 %s208, 1
    %p212 = scmp.eq.s32.totalorder %s17, 1
    %p213 = scmp.ne.s32.totalorder %s208, %s210
    %p214 = scmp.eq.s32.totalorder %s17, 0
    %p215 = por %p213, %p214
    %p216 = scmp.ne.s32.totalorder %s208, %s210
    %p217 = scmp.eq.s32.totalorder %s22, 1
    %p218 = por %p216, %p217
    %p219 = scmp.ne.s32.totalorder %s210, %s211
    %p220 = scmp.eq.s32.totalorder %s22, 0
    %p221 = por %p219, %p220
    %p222 = scmp.ne.s32.totalorder %s210, %s211
    %p223 = scmp.eq.s32.totalorder %s23, 1
    %p224 = por %p222, %p223
    %p226 = scmp.ne.s32.totalorder %s211, %s225
    %p227 = scmp.eq.s32.totalorder %s23, 0
    %p228 = por %p226, %p227
    %s229 = ssub.s32 %s17, %s24
    %p230 = scmp.eq.s32.totalorder %s229, 0
    %s232 = sadd.s32 %s231, 1
    %s233 = scalar_select %p230, %s231, %s232
    %p236 = pneg %p230
    %p237 = scmp.eq.s32.totalorder %s17, 1
    %p238 = por %p236, %p237
    %p239 = scmp.ne.s32.totalorder %s231, %s234
    %p240 = scmp.eq.s32.totalorder %s17, 0
    %p241 = por %p239, %p240
    %p242 = scmp.ne.s32.totalorder %s231, %s234
    %p243 = scmp.eq.s32.totalorder %s22, 1
    %p244 = por %p242, %p243
    %p245 = scmp.ne.s32.totalorder %s234, %s235
    %p246 = scmp.eq.s32.totalorder %s22, 0
    %p247 = por %p245, %p246
    %p248 = scmp.ne.s32.totalorder %s234, %s235
    %p249 = scmp.eq.s32.totalorder %s23, 1
    %p250 = por %p248, %p249
    %p252 = scmp.ne.s32.totalorder %s235, %s251
    %p253 = scmp.eq.s32.totalorder %s23, 0
    %p254 = por %p252, %p253
    %s255 = ssub.s32 %s17, %s24
    %p256 = scmp.eq.s32.totalorder %s255, 0
    %s258 = sadd.s32 %s257, 1
    %s259 = scalar_select %p256, %s257, %s258
    %p262 = pneg %p256
    %p263 = scmp.eq.s32.totalorder %s17, 1
    %p264 = por %p262, %p263
    %p265 = scmp.ne.s32.totalorder %s257, %s260
    %p266 = scmp.eq.s32.totalorder %s17, 0
    %p267 = por %p265, %p266
    %p268 = scmp.ne.s32.totalorder %s257, %s260
    %p269 = scmp.eq.s32.totalorder %s22, 1
    %p270 = por %p268, %p269
    %p271 = scmp.ne.s32.totalorder %s260, %s261
    %p272 = scmp.eq.s32.totalorder %s22, 0
    %p273 = por %p271, %p272
    %p274 = scmp.ne.s32.totalorder %s260, %s261
    %p275 = scmp.eq.s32.totalorder %s23, 1
    %p276 = por %p274, %p275
    %p278 = scmp.ne.s32.totalorder %s261, %s277
    %p279 = scmp.eq.s32.totalorder %s23, 0
    %p280 = por %p278, %p279
    %p281 = scmp.le.s32.totalorder 1, %s17
    %p282 = scmp.lt.s32.totalorder %s17, 3
    %p283 = pnand %p281, %p282
    %p284 = pneg %p283
    // Predicated region
    $region9: #{art_editing_test_forward.1} parent=5 // pred_check
      _
    $region10: #{art_editing_test_forward.1} parent=5 // pred_check_branch
      %286 = sbr.rel (%p283) target = $region12
    $region11: #{art_editing_test_forward.1} parent=5 // pred_region
      %s287 = ssub.s32 %s17, 1
      // Predicated region
      $region13: #{art_editing_test_forward.1} parent=11 // pred_check
        %p288 = pneg %p64
      $region14: #{art_editing_test_forward.1} parent=11 // pred_check_branch
        %290 = sbr.rel (%p288) target = $region16
      $region15: #{art_editing_test_forward.1} parent=11 // pred_region
        _
      $region16: #{art_editing_test_forward.1} parent=11 // pred_fallthru
        _
      // Predicated region
      $region17: #{art_editing_test_forward.1} parent=11 // pred_check
        %p291 = pneg %p85
      $region18: #{art_editing_test_forward.1} parent=11 // pred_check_branch
        %293 = sbr.rel (%p291) target = $region20
      $region19: #{art_editing_test_forward.1} parent=11 // pred_region
        _
      $region20: #{art_editing_test_forward.1} parent=11 // pred_fallthru
        _
      // Predicated region
      $region21: #{art_editing_test_forward.1} parent=11 // pred_check
        %p294 = pneg %p106
      $region22: #{art_editing_test_forward.1} parent=11 // pred_check_branch
        %296 = sbr.rel (%p294) target = $region24
      $region23: #{art_editing_test_forward.1} parent=11 // pred_region
        _
      $region24: #{art_editing_test_forward.1} parent=11 // pred_fallthru
        _
      // Predicated region
      $region25: #{art_editing_test_forward.1} parent=11 // pred_check
        %p297 = pneg %p153
      $region26: #{art_editing_test_forward.1} parent=11 // pred_check_branch
        %299 = sbr.rel (%p297) target = $region28
      $region27: #{art_editing_test_forward.1} parent=11 // pred_region
        _
      $region28: #{art_editing_test_forward.1} parent=11 // pred_fallthru
        _
      // Predicated region
      $region29: #{art_editing_test_forward.1} parent=11 // pred_check
        %p300 = pneg %p174
      $region30: #{art_editing_test_forward.1} parent=11 // pred_check_branch
        %302 = sbr.rel (%p300) target = $region32
      $region31: #{art_editing_test_forward.1} parent=11 // pred_region
        _
      $region32: #{art_editing_test_forward.1} parent=11 // pred_fallthru
        _
      // Predicated region
      $region33: #{art_editing_test_forward.1} parent=11 // pred_check
        %p303 = pneg %p221
      $region34: #{art_editing_test_forward.1} parent=11 // pred_check_branch
        %305 = sbr.rel (%p303) target = $region36
      $region35: #{art_editing_test_forward.1} parent=11 // pred_region
        _
      $region36: #{art_editing_test_forward.1} parent=11 // pred_fallthru
        _
    $region12: #{art_editing_test_forward.1} parent=5 // pred_fallthru
      _
    %p306 = scmp.lt.s32.totalorder %s17, 2
    // Predicated region
    $region37: #{art_editing_test_forward.1} parent=5 // pred_check
      %p307 = pneg %p306
    $region38: #{art_editing_test_forward.1} parent=5 // pred_check_branch
      %309 = sbr.rel (%p307) target = $region40
    $region39: #{art_editing_test_forward.1} parent=5 // pred_region
      // Predicated region
      $region41: #{art_editing_test_forward.1} parent=39 // pred_check
        %p310 = pneg %p37
      $region42: #{art_editing_test_forward.1} parent=39 // pred_check_branch
        %312 = sbr.rel (%p310) target = $region44
      $region43: #{art_editing_test_forward.1} parent=39 // pred_region
        %s313 = smul.u32 2, %s17
        %p314 = scmp.lt.s32.totalorder %s313, 3
        %s315 = scalar_select %p314, %s313, 3
        %s316 = smul.addr %s315, 8
        %s317 = scalar_lea.vmem %s0, %s316
        %s318 = smul.u32 2, %s17
      $region44: #{art_editing_test_forward.1} parent=39 // pred_fallthru
        _
      // Predicated region
      $region45: #{art_editing_test_forward.1} parent=39 // pred_check
        %p319 = pneg %p126
      $region46: #{art_editing_test_forward.1} parent=39 // pred_check_branch
        %321 = sbr.rel (%p319) target = $region48
      $region47: #{art_editing_test_forward.1} parent=39 // pred_region
        %p322 = scmp.lt.s32.totalorder %s17, 1
        %s323 = scalar_select %p322, %s17, 1
        %s324 = smul.addr %s323, 8
        %s325 = scalar_lea.vmem %s4, %s324
      $region48: #{art_editing_test_forward.1} parent=39 // pred_fallthru
        _
      // Predicated region
      $region49: #{art_editing_test_forward.1} parent=39 // pred_check
        %p326 = pneg %p194
      $region50: #{art_editing_test_forward.1} parent=39 // pred_check_branch
        %328 = sbr.rel (%p326) target = $region52
      $region51: #{art_editing_test_forward.1} parent=39 // pred_region
        %p329 = scmp.lt.s32.totalorder %s17, 1
        %s330 = scalar_select %p329, %s17, 1
        %s331 = smul.addr %s330, 8
        %s332 = scalar_lea.vmem %s7, %s331
      $region52: #{art_editing_test_forward.1} parent=39 // pred_fallthru
        _
    $region40: #{art_editing_test_forward.1} parent=5 // pred_fallthru
      _
    %p333 = scmp.le.s32.totalorder 1, %s17
    %p334 = scmp.lt.s32.totalorder %s17, 3
    %p335 = pnand %p333, %p334
    %p336 = pneg %p335
    // Predicated region
    $region53: #{art_editing_test_forward.1} parent=5 // pred_check
      _
    $region54: #{art_editing_test_forward.1} parent=5 // pred_check_branch
      %338 = sbr.rel (%p335) target = $region56
    $region55: #{art_editing_test_forward.1} parent=5 // pred_region
      %s339 = ssub.s32 %s17, 1
      %s340 = smul.u32 2, %s22
      %p341 = scmp.lt.s32.totalorder %s340, 3
      %s342 = scalar_select %p341, %s340, 3
      %s343 = smul.addr %s342, 8
      %s344 = scalar_lea.vmem %s0, %s343
      %p345 = pneg %p43
      %p346 = pneg %p40
      %p347 = pneg %p64
      %p348 = pneg %p61
      %p349 = pneg %p85
      %p350 = pneg %p82
      %p351 = pneg %p106
      %p352 = pneg %p103
      %p353 = scmp.lt.s32.totalorder %s22, 1
      %s354 = scalar_select %p353, %s22, 1
      %s355 = smul.addr %s354, 8
      %s356 = scalar_lea.vmem %s4, %s355
      %p357 = pneg %p132
      %p358 = pneg %p129
      %p359 = pneg %p153
      %p360 = pneg %p150
      %p361 = pneg %p174
      %p362 = pneg %p171
      %p363 = scmp.lt.s32.totalorder %s22, 1
      %s364 = scalar_select %p363, %s22, 1
      %s365 = smul.addr %s364, 8
      %s366 = scalar_lea.vmem %s7, %s365
      %p367 = pneg %p200
      %p368 = pneg %p197
      %p369 = pneg %p221
      %p370 = pneg %p218
      %p371 = pneg %p247
      %p372 = pneg %p244
      %s373 = smul.u32 2, %s22
      %p374 = scmp.lt.s32.totalorder %s373, 3
      %s375 = scalar_select %p374, %s373, 3
      %s376 = smul.addr %s375, 8
      %s377 = scalar_lea.vmem %s9, %s376
      %p378 = pneg %p273
      %p379 = pneg %p270
      %s380 = smul.u32 2, %s22
      %p381 = scmp.lt.s32.totalorder %s380, 3
      %s382 = scalar_select %p381, %s380, 3
      %s383 = smul.addr %s382, 8
      %s384 = scalar_lea.vmem %s10, %s383
      %s385 = smul.u32 2, %s22
      %p386 = scmp.lt.s32.totalorder %s385, 3
      %s387 = scalar_select %p386, %s385, 3
      %s388 = smul.addr %s387, 8
      %s389 = scalar_lea.vmem %s0, %s388
      %s390 = smul.u32 2, %s22
      %p391 = scmp.lt.s32.totalorder %s22, 1
      %s392 = scalar_select %p391, %s22, 1
      %s393 = smul.addr %s392, 8
      %s394 = scalar_lea.vmem %s4, %s393
      %p395 = scmp.lt.s32.totalorder %s22, 1
      %s396 = scalar_select %p395, %s22, 1
      %s397 = smul.addr %s396, 8
      %s398 = scalar_lea.vmem %s7, %s397
      %s399 = smul.u32 2, %s22
      %p400 = scmp.lt.s32.totalorder %s399, 3
      %s401 = scalar_select %p400, %s399, 3
      %s402 = smul.addr %s401, 8
      %s403 = scalar_lea.vmem %s9, %s402
      %s404 = smul.u32 2, %s22
      %s405 = smul.u32 2, %s22
      %p406 = scmp.lt.s32.totalorder %s405, 3
      %s407 = scalar_select %p406, %s405, 3
      %s408 = smul.addr %s407, 8
      %s409 = scalar_lea.vmem %s10, %s408
      %s410 = smul.u32 2, %s22
      %v411 = vld [vmem:[%s1] sm:$0xff]
      %v412 = vld [vmem:[%s1 + $0x8] sm:$0xff]
      %v413 = vld [vmem:[%s1 + $0x10] sm:$0x1]
      %v414 = vld [vmem:[%s1 + $0x18] sm:$0x1]
      %v415 = vld [vmem:[%s2] sm:$0xff]
      %v416 = vld [vmem:[%s2 + $0x8] sm:$0xff]
      %v417 = vld [vmem:[%s2 + $0x10] sm:$0xff]
      %v418 = vld [vmem:[%s2 + $0x18] sm:$0xff]
      %v419 = vlaneseq
      %v420 = vshrl.u32 %v419, 7
      %vm421 = vcmp.eq.s32.totalorder %v420, 0
      %v422 = vsel %vm421, 1, 0
      %v423 = vcvt.s32.f32 %v422
      %v424 = vld [vmem:[%s389] sm:$0xff]
      %v425 = vld [vmem:[%s389 + $0x8] sm:$0xff]
      %426 = vrot.lane.b32.xlu0 %v424, 17
      %v427 = vpop.permute.xlu0 %426
      %428 = vrot.lane.b32.xlu0 %v425, 17
      %v429 = vpop.permute.xlu0 %428
      %v430 = vlaneseq
      %v431 = vand.u32 %v430, 127
      %vm432 = vcmp.lt.s32.totalorder %v431, 17
      %v433 = vsel %vm432, %v427, %v429
      %v434 = vsel %vm432, %v429, %v427
      %v435 = vlaneseq
      %v436 = vshrl.u32 %v435, 7
      %v437 = vsub.s32 0, %v436
      %v438 = vrot.slane %v411, %v437
      %v439 = vlaneseq
      %v440 = vshrl.u32 %v439, 7
      %v441 = vsub.s32 0, %v440
      %v442 = vrot.slane %v412, %v441
      %v443 = vmul.f32 %v434, %v438
      %v444 = vmul.f32 %v433, %v442
      %445 = vst [vmem:[#allocation2] sm:$0xff] %v443
      %446 = vst [vmem:[#allocation2 + $0x8] sm:$0xff] %v444
      %447 = vrot.lane.b32.xlu0 %v424, 16
      %v448 = vpop.permute.xlu0 %447
      %449 = vrot.lane.b32.xlu0 %v425, 16
      %v450 = vpop.permute.xlu0 %449
      %vm451 = vcmp.lt.s32.totalorder %v431, 16
      %v452 = vsel %vm451, %v448, %v450
      %v453 = vsel %vm451, %v450, %v448
      %v454 = vlaneseq
      %v455 = vshrl.u32 %v454, 7
      %v456 = vsub.s32 1, %v455
      %v457 = vrot.slane %v411, %v456
      %v458 = vlaneseq
      %v459 = vshrl.u32 %v458, 7
      %v460 = vsub.s32 1, %v459
      %v461 = vrot.slane %v412, %v460
      %v462 = vmul.f32 %v453, %v457
      %v463 = vmul.f32 %v452, %v461
      %464 = vst [vmem:[#allocation2 + $0x10] sm:$0xff] %v462
      %465 = vst [vmem:[#allocation2 + $0x18] sm:$0xff] %v463
      %466 = vrot.lane.b32.xlu0 %v424, 15
      %v467 = vpop.permute.xlu0 %466
      %468 = vrot.lane.b32.xlu0 %v425, 15
      %v469 = vpop.permute.xlu0 %468
      %vm470 = vcmp.lt.s32.totalorder %v431, 15
      %v471 = vsel %vm470, %v467, %v469
      %v472 = vsel %vm470, %v469, %v467
      %v473 = vlaneseq
      %v474 = vshrl.u32 %v473, 7
      %v475 = vsub.s32 2, %v474
      %v476 = vrot.slane %v411, %v475
      %v477 = vlaneseq
      %v478 = vshrl.u32 %v477, 7
      %v479 = vsub.s32 2, %v478
      %v480 = vrot.slane %v412, %v479
      %v481 = vmul.f32 %v472, %v476
      %v482 = vmul.f32 %v471, %v480
      %483 = vst [vmem:[#allocation2 + $0x20] sm:$0xff] %v481
      %484 = vst [vmem:[#allocation2 + $0x28] sm:$0xff] %v482
      %485 = vrot.lane.b32.xlu0 %v424, 1
      %v486 = vpop.permute.xlu0 %485
      %487 = vrot.lane.b32.xlu0 %v425, 1
      %v488 = vpop.permute.xlu0 %487
      %vm489 = vcmp.lt.s32.totalorder %v431, 1
      %v490 = vsel %vm489, %v486, %v488
      %v491 = vsel %vm489, %v488, %v486
      %v492 = vlaneseq
      %v493 = vshrl.u32 %v492, 7
      %v494 = vsub.s32 3, %v493
      %v495 = vrot.slane %v411, %v494
      %v496 = vlaneseq
      %v497 = vshrl.u32 %v496, 7
      %v498 = vsub.s32 3, %v497
      %v499 = vrot.slane %v412, %v498
      %v500 = vmul.f32 %v491, %v495
      %v501 = vmul.f32 %v490, %v499
      %502 = vst [vmem:[#allocation2 + $0x30] sm:$0xff] %v500
      %503 = vst [vmem:[#allocation2 + $0x38] sm:$0xff] %v501
      %v504 = vlaneseq
      %v505 = vshrl.u32 %v504, 7
      %v506 = vsub.s32 4, %v505
      %v507 = vrot.slane %v411, %v506
      %v508 = vlaneseq
      %v509 = vshrl.u32 %v508, 7
      %v510 = vsub.s32 4, %v509
      %v511 = vrot.slane %v412, %v510
      %v512 = vmul.f32 %v424, %v507
      %v513 = vmul.f32 %v425, %v511
      %514 = vst [vmem:[#allocation2 + $0x40] sm:$0xff] %v512
      %515 = vst [vmem:[#allocation2 + $0x48] sm:$0xff] %v513
      %516 = vrot.lane.b32.xlu0 %v424, 127
      %v517 = vpop.permute.xlu0 %516
      %518 = vrot.lane.b32.xlu0 %v425, 127
      %v519 = vpop.permute.xlu0 %518
      %vm520 = vcmp.lt.s32.totalorder %v431, 127
      %v521 = vsel %vm520, %v517, %v519
      %v522 = vsel %vm520, %v519, %v517
      %v523 = vlaneseq
      %v524 = vshrl.u32 %v523, 7
      %v525 = vsub.s32 5, %v524
      %v526 = vrot.slane %v411, %v525
      %v527 = vlaneseq
      %v528 = vshrl.u32 %v527, 7
      %v529 = vsub.s32 5, %v528
      %v530 = vrot.slane %v412, %v529
      %v531 = vmul.f32 %v521, %v526
      %v532 = vmul.f32 %v522, %v530
      %533 = vst [vmem:[#allocation2 + $0x50] sm:$0xff] %v531
      %534 = vst [vmem:[#allocation2 + $0x58] sm:$0xff] %v532
      %535 = vrot.lane.b32.xlu0 %v424, 113
      %v536 = vpop.permute.xlu0 %535
      %537 = vrot.lane.b32.xlu0 %v425, 113
      %v538 = vpop.permute.xlu0 %537
      %vm539 = vcmp.lt.s32.totalorder %v431, 113
      %v540 = vsel %vm539, %v536, %v538
      %v541 = vsel %vm539, %v538, %v536
      %v542 = vlaneseq
      %v543 = vshrl.u32 %v542, 7
      %v544 = vsub.s32 6, %v543
      %v545 = vrot.slane %v411, %v544
      %v546 = vlaneseq
      %v547 = vshrl.u32 %v546, 7
      %v548 = vsub.s32 6, %v547
      %v549 = vrot.slane %v412, %v548
      %v550 = vmul.f32 %v540, %v545
      %v551 = vmul.f32 %v541, %v549
      %552 = vst [vmem:[#allocation2 + $0x60] sm:$0xff] %v550
      %553 = vst [vmem:[#allocation2 + $0x68] sm:$0xff] %v551
      %554 = vrot.lane.b32.xlu0 %v424, 112
      %v555 = vpop.permute.xlu0 %554
      %556 = vrot.lane.b32.xlu0 %v425, 112
      %v557 = vpop.permute.xlu0 %556
      %vm558 = vcmp.lt.s32.totalorder %v431, 112
      %v559 = vsel %vm558, %v555, %v557
      %v560 = vsel %vm558, %v557, %v555
      %v561 = vlaneseq
      %v562 = vshrl.u32 %v561, 7
      %v563 = vsub.s32 7, %v562
      %v564 = vrot.slane %v411, %v563
      %v565 = vlaneseq
      %v566 = vshrl.u32 %v565, 7
      %v567 = vsub.s32 7, %v566
      %v568 = vrot.slane %v412, %v567
      %v569 = vmul.f32 %v559, %v564
      %v570 = vmul.f32 %v560, %v568
      %571 = vst [vmem:[#allocation2 + $0x70] sm:$0xff] %v569
      %572 = vst [vmem:[#allocation2 + $0x78] sm:$0xff] %v570
      %573 = vrot.lane.b32.xlu0 %v424, 111
      %v574 = vpop.permute.xlu0 %573
      %575 = vrot.lane.b32.xlu0 %v425, 111
      %v576 = vpop.permute.xlu0 %575
      %vm577 = vcmp.lt.s32.totalorder %v431, 111
      %v578 = vsel %vm577, %v574, %v576
      %v579 = vsel %vm577, %v576, %v574
      %v580 = vlaneseq
      %v581 = vshrl.u32 %v580, 7
      %v582 = vsub.s32 0, %v581
      %v583 = vrot.slane %v413, %v582
      %v584 = vlaneseq
      %v585 = vshrl.u32 %v584, 7
      %v586 = vsub.s32 0, %v585
      %v587 = vrot.slane %v414, %v586
      %v588 = vmul.f32 %v578, %v583
      %v589 = vmul.f32 %v579, %v587
      %590 = vst [vmem:[#allocation2 + $0x80] sm:$0xff] %v588
      %591 = vst [vmem:[#allocation2 + $0x88] sm:$0xff] %v589
      %v592 = vld [vmem:[%s3] sm:$0xff]
      %v593 = vld [vmem:[#allocation2] sm:$0xff]
      %v594 = vld [vmem:[#allocation2 + $0x8] sm:$0xff]
      %v595 = vld [vmem:[#allocation2 + $0x10] sm:$0xff]
      %v596 = vld [vmem:[#allocation2 + $0x18] sm:$0xff]
      %v597 = vld [vmem:[#allocation2 + $0x20] sm:$0xff]
      %v598 = vld [vmem:[#allocation2 + $0x28] sm:$0xff]
      %v599 = vld [vmem:[#allocation2 + $0x30] sm:$0xff]
      %v600 = vld [vmem:[#allocation2 + $0x38] sm:$0xff]
      %v601 = vld [vmem:[#allocation2 + $0x40] sm:$0xff]
      %v602 = vld [vmem:[#allocation2 + $0x48] sm:$0xff]
      %v603 = vld [vmem:[#allocation2 + $0x50] sm:$0xff]
      %v604 = vld [vmem:[#allocation2 + $0x58] sm:$0xff]
      %v605 = vld [vmem:[#allocation2 + $0x60] sm:$0xff]
      %v606 = vld [vmem:[#allocation2 + $0x68] sm:$0xff]
      %v607 = vld [vmem:[#allocation2 + $0x70] sm:$0xff]
      %v608 = vld [vmem:[#allocation2 + $0x78] sm:$0xff]
      %v609 = vld [vmem:[#allocation2 + $0x80] sm:$0xff]
      %v610 = vld [vmem:[#allocation2 + $0x88] sm:$0xff]
      %v611 = vld [vmem:[%s394] sm:$0xff]
      %vm612 = vcmask 130048
      %v614 = vsel %vm612, %v611, 0
      %616 = vmatprep.subr.mxu0 %v416
      %617 = vmatpush1.msra.mxu0 %v415
      %618 = vmatprep.subr.mxu0 %v418
      %619 = vmatpush1.msra.mxu0 %v417
      %620 = vmatprep.subr.mxu0 0.0
      %621 = vmatpush1.msra.mxu0 0.0
      %622 = vmatprep.subr.mxu0 0.0
      %623 = vmatpush1.msra.mxu0 0.0
      %624 = vmatprep.subr.mxu0 0.0
      %625 = vmatpush1.msra.mxu0 0.0
      %626 = vmatprep.subr.mxu0 0.0
      %627 = vmatpush1.msra.mxu0 0.0
      %628 = vmatprep.subr.mxu0 0.0
      %629 = vmatpush1.msra.mxu0 0.0
      %630 = vmatprep.subr.mxu0 0.0
      %631 = vmatpush1.msra.mxu0 0.0
      %632 = vmatprep.subr.mxu0 0.0
      %633 = vmatpush1.msra.mxu0 0.0
      %634 = vmatprep.subr.mxu0 0.0
      %635 = vmatpush1.msra.mxu0 0.0
      %636 = vmatprep.subr.mxu0 0.0
      %637 = vmatpush1.msra.mxu0 0.0
      %638 = vmatprep.subr.mxu0 0.0
      %639 = vmatpush1.msra.mxu0 0.0
      %640 = vmatprep.subr.mxu0 0.0
      %641 = vmatpush1.msra.mxu0 0.0
      %642 = vmatprep.subr.mxu0 0.0
      %643 = vmatpush1.msra.mxu0 0.0
      %644 = vmatprep.subr.mxu0 0.0
      %645 = vmatpush1.msra.mxu0 0.0
      %646 = vmatprep.subr.mxu0 0.0
      %647 = vmatpush1.msra.mxu0 0.0
      %648 = vmatprep.subr.mxu0 0.0
      %649 = vmatpush1.msra.mxu0 0.0
      %650 = vmatprep.subr.mxu0 0.0
      %651 = vmatpush1.msra.mxu0 0.0
      %652 = vmatprep.subr.mxu0 0.0
      %653 = vmatpush1.msra.mxu0 0.0
      %654 = vmatprep.subr.mxu0 0.0
      %655 = vmatpush1.msra.mxu0 0.0
      %656 = vmatprep.subr.mxu0 0.0
      %657 = vmatpush1.msra.mxu0 0.0
      %658 = vmatprep.subr.mxu0 0.0
      %659 = vmatpush1.msra.mxu0 0.0
      %660 = vmatprep.subr.mxu0 0.0
      %661 = vmatpush1.msra.mxu0 0.0
      %662 = vmatprep.subr.mxu0 0.0
      %663 = vmatpush1.msra.mxu0 0.0
      %664 = vmatprep.subr.mxu0 0.0
      %665 = vmatpush1.msra.mxu0 0.0
      %666 = vmatprep.subr.mxu0 0.0
      %667 = vmatpush1.msra.mxu0 0.0
      %668 = vmatprep.subr.mxu0 0.0
      %669 = vmatpush1.msra.mxu0 0.0
      %670 = vmatprep.subr.mxu0 0.0
      %671 = vmatpush1.msra.mxu0 0.0
      %672 = vmatprep.subr.mxu0 0.0
      %673 = vmatpush1.msra.mxu0 0.0
      %674 = vmatprep.subr.mxu0 0.0
      %675 = vmatpush1.msra.mxu0 0.0
      %676 = vmatprep.subr.mxu0 0.0
      %677 = vmatpush1.msra.mxu0 0.0
      %678 = vmatprep.subr.mxu0 0.0
      %679 = vmatpush1.msra.mxu0 0.0
      %680 = vmatprep.mubr.f32.mxu0 0.0
      %681 = vmatmul.mubr.f32.gmra.mrb[0].mxu0 %v614
      %v682 = vpop.f32.mrb[0].mxu0
      %v683 = vadd.f32 0.0, %v682
      %v684 = vpop.f32.mrb[0].mxu0
      %v685 = vadd.f32 0.0, %v684
      %686 = vdwg.mxu0
      %vm687 = vcmask 588800
      %v689 = vsel %vm687, %v592, 0
      %691 = vmatprep.subr.mxu0 %v594
      %692 = vmatpush1.msra.mxu0 %v593
      %693 = vmatprep.subr.mxu0 %v596
      %694 = vmatpush1.msra.mxu0 %v595
      %695 = vmatprep.subr.mxu0 %v598
      %696 = vmatpush1.msra.mxu0 %v597
      %697 = vmatprep.subr.mxu0 %v600
      %698 = vmatpush1.msra.mxu0 %v599
      %699 = vmatprep.subr.mxu0 %v602
      %700 = vmatpush1.msra.mxu0 %v601
      %701 = vmatprep.subr.mxu0 %v604
      %702 = vmatpush1.msra.mxu0 %v603
      %703 = vmatprep.subr.mxu0 %v606
      %704 = vmatpush1.msra.mxu0 %v605
      %705 = vmatprep.subr.mxu0 %v608
      %706 = vmatpush1.msra.mxu0 %v607
      %707 = vmatprep.subr.mxu0 %v610
      %708 = vmatpush1.msra.mxu0 %v609
      %709 = vmatprep.subr.mxu0 0.0
      %710 = vmatpush1.msra.mxu0 0.0
      %711 = vmatprep.subr.mxu0 0.0
      %712 = vmatpush1.msra.mxu0 0.0
      %713 = vmatprep.subr.mxu0 0.0
      %714 = vmatpush1.msra.mxu0 0.0
      %715 = vmatprep.subr.mxu0 0.0
      %716 = vmatpush1.msra.mxu0 0.0
      %717 = vmatprep.subr.mxu0 0.0
      %718 = vmatpush1.msra.mxu0 0.0
      %719 = vmatprep.subr.mxu0 0.0
      %720 = vmatpush1.msra.mxu0 0.0
      %721 = vmatprep.subr.mxu0 0.0
      %722 = vmatpush1.msra.mxu0 0.0
      %723 = vmatprep.subr.mxu0 0.0
      %724 = vmatpush1.msra.mxu0 0.0
      %725 = vmatprep.subr.mxu0 0.0
      %726 = vmatpush1.msra.mxu0 0.0
      %727 = vmatprep.subr.mxu0 0.0
      %728 = vmatpush1.msra.mxu0 0.0
      %729 = vmatprep.subr.mxu0 0.0
      %730 = vmatpush1.msra.mxu0 0.0
      %731 = vmatprep.subr.mxu0 0.0
      %732 = vmatpush1.msra.mxu0 0.0
      %733 = vmatprep.subr.mxu0 0.0
      %734 = vmatpush1.msra.mxu0 0.0
      %735 = vmatprep.subr.mxu0 0.0
      %736 = vmatpush1.msra.mxu0 0.0
      %737 = vmatprep.subr.mxu0 0.0
      %738 = vmatpush1.msra.mxu0 0.0
      %739 = vmatprep.subr.mxu0 0.0
      %740 = vmatpush1.msra.mxu0 0.0
      %741 = vmatprep.subr.mxu0 0.0
      %742 = vmatpush1.msra.mxu0 0.0
      %743 = vmatprep.subr.mxu0 0.0
      %744 = vmatpush1.msra.mxu0 0.0
      %745 = vmatprep.subr.mxu0 0.0
      %746 = vmatpush1.msra.mxu0 0.0
      %747 = vmatprep.subr.mxu0 0.0
      %748 = vmatpush1.msra.mxu0 0.0
      %749 = vmatprep.subr.mxu0 0.0
      %750 = vmatpush1.msra.mxu0 0.0
      %751 = vmatprep.subr.mxu0 0.0
      %752 = vmatpush1.msra.mxu0 0.0
      %753 = vmatprep.subr.mxu0 0.0
      %754 = vmatpush1.msra.mxu0 0.0
      %755 = vmatprep.mubr.f32.mxu0 0.0
      %756 = vmatmul.mubr.f32.gmra.mrb[0].mxu0 %v689
      %v757 = vpop.f32.mrb[0].mxu0
      %v758 = vadd.f32 %v683, %v757
      %v759 = vpop.f32.mrb[0].mxu0
      %v760 = vadd.f32 %v685, %v759
      %761 = vdwg.mxu0
      %v762 = vmax.f32 %v758, 0.0
      %v763 = vmax.f32 %v760, 0.0
      %764 = vrot.lane.b32.xlu0 %v762, 17
      %v765 = vpop.permute.xlu0 %764
      %766 = vrot.lane.b32.xlu0 %v763, 17
      %v767 = vpop.permute.xlu0 %766
      %v768 = vsel %vm432, %v765, %v767
      %v769 = vsel %vm432, %v767, %v765
      %v770 = vmul.f32 %v769, %v438
      %v771 = vmul.f32 %v768, %v442
      %772 = vst [vmem:[#allocation3] sm:$0xff] %v770
      %773 = vst [vmem:[#allocation3 + $0x8] sm:$0xff] %v771
      %774 = vrot.lane.b32.xlu0 %v762, 16
      %v775 = vpop.permute.xlu0 %774
      %776 = vrot.lane.b32.xlu0 %v763, 16
      %v777 = vpop.permute.xlu0 %776
      %v778 = vsel %vm451, %v775, %v777
      %v779 = vsel %vm451, %v777, %v775
      %v780 = vmul.f32 %v779, %v457
      %v781 = vmul.f32 %v778, %v461
      %782 = vst [vmem:[#allocation3 + $0x10] sm:$0xff] %v780
      %783 = vst [vmem:[#allocation3 + $0x18] sm:$0xff] %v781
      %784 = vrot.lane.b32.xlu0 %v762, 15
      %v785 = vpop.permute.xlu0 %784
      %786 = vrot.lane.b32.xlu0 %v763, 15
      %v787 = vpop.permute.xlu0 %786
      %v788 = vsel %vm470, %v785, %v787
      %v789 = vsel %vm470, %v787, %v785
      %v790 = vmul.f32 %v789, %v476
      %v791 = vmul.f32 %v788, %v480
      %792 = vst [vmem:[#allocation3 + $0x20] sm:$0xff] %v790
      %793 = vst [vmem:[#allocation3 + $0x28] sm:$0xff] %v791
      %794 = vrot.lane.b32.xlu0 %v762, 1
      %v795 = vpop.permute.xlu0 %794
      %796 = vrot.lane.b32.xlu0 %v763, 1
      %v797 = vpop.permute.xlu0 %796
      %v798 = vsel %vm489, %v795, %v797
      %v799 = vsel %vm489, %v797, %v795
      %v800 = vmul.f32 %v799, %v495
      %v801 = vmul.f32 %v798, %v499
      %802 = vst [vmem:[#allocation3 + $0x30] sm:$0xff] %v800
      %803 = vst [vmem:[#allocation3 + $0x38] sm:$0xff] %v801
      %v804 = vmul.f32 %v762, %v507
      %v805 = vmul.f32 %v763, %v511
      %806 = vst [vmem:[#allocation3 + $0x40] sm:$0xff] %v804
      %807 = vst [vmem:[#allocation3 + $0x48] sm:$0xff] %v805
      %808 = vrot.lane.b32.xlu0 %v762, 127
      %v809 = vpop.permute.xlu0 %808
      %810 = vrot.lane.b32.xlu0 %v763, 127
      %v811 = vpop.permute.xlu0 %810
      %v812 = vsel %vm520, %v809, %v811
      %v813 = vsel %vm520, %v811, %v809
      %v814 = vmul.f32 %v812, %v526
      %v815 = vmul.f32 %v813, %v530
      %816 = vst [vmem:[#allocation3 + $0x50] sm:$0xff] %v814
      %817 = vst [vmem:[#allocation3 + $0x58] sm:$0xff] %v815
      %818 = vrot.lane.b32.xlu0 %v762, 113
      %v819 = vpop.permute.xlu0 %818
      %820 = vrot.lane.b32.xlu0 %v763, 113
      %v821 = vpop.permute.xlu0 %820
      %v822 = vsel %vm539, %v819, %v821
      %v823 = vsel %vm539, %v821, %v819
      %v824 = vmul.f32 %v822, %v545
      %v825 = vmul.f32 %v823, %v549
      %826 = vst [vmem:[#allocation3 + $0x60] sm:$0xff] %v824
      %827 = vst [vmem:[#allocation3 + $0x68] sm:$0xff] %v825
      %828 = vrot.lane.b32.xlu0 %v762, 112
      %v829 = vpop.permute.xlu0 %828
      %830 = vrot.lane.b32.xlu0 %v763, 112
      %v831 = vpop.permute.xlu0 %830
      %v832 = vsel %vm558, %v829, %v831
      %v833 = vsel %vm558, %v831, %v829
      %v834 = vmul.f32 %v832, %v564
      %v835 = vmul.f32 %v833, %v568
      %836 = vst [vmem:[#allocation3 + $0x70] sm:$0xff] %v834
      %837 = vst [vmem:[#allocation3 + $0x78] sm:$0xff] %v835
      %838 = vrot.lane.b32.xlu0 %v762, 111
      %v839 = vpop.permute.xlu0 %838
      %840 = vrot.lane.b32.xlu0 %v763, 111
      %v841 = vpop.permute.xlu0 %840
      %v842 = vsel %vm577, %v839, %v841
      %v843 = vsel %vm577, %v841, %v839
      %v844 = vmul.f32 %v842, %v583
      %v845 = vmul.f32 %v843, %v587
      %846 = vst [vmem:[#allocation3 + $0x80] sm:$0xff] %v844
      %847 = vst [vmem:[#allocation3 + $0x88] sm:$0xff] %v845
      %848 = vst [vmem:[#allocation3 + $0x90] sm:$0xff] %v423
      %849 = vst [vmem:[#allocation3 + $0x98] sm:$0xff] %v423
      %v850 = vld [vmem:[%s5] sm:$0xff]
      %v851 = vld [vmem:[#allocation3] sm:$0xff]
      %v852 = vld [vmem:[#allocation3 + $0x8] sm:$0xff]
      %v853 = vld [vmem:[#allocation3 + $0x10] sm:$0xff]
      %v854 = vld [vmem:[#allocation3 + $0x18] sm:$0xff]
      %v855 = vld [vmem:[#allocation3 + $0x20] sm:$0xff]
      %v856 = vld [vmem:[#allocation3 + $0x28] sm:$0xff]
      %v857 = vld [vmem:[#allocation3 + $0x30] sm:$0xff]
      %v858 = vld [vmem:[#allocation3 + $0x38] sm:$0xff]
      %v859 = vld [vmem:[#allocation3 + $0x40] sm:$0xff]
      %v860 = vld [vmem:[#allocation3 + $0x48] sm:$0xff]
      %v861 = vld [vmem:[#allocation3 + $0x50] sm:$0xff]
      %v862 = vld [vmem:[#allocation3 + $0x58] sm:$0xff]
      %v863 = vld [vmem:[#allocation3 + $0x60] sm:$0xff]
      %v864 = vld [vmem:[#allocation3 + $0x68] sm:$0xff]
      %v865 = vld [vmem:[#allocation3 + $0x70] sm:$0xff]
      %v866 = vld [vmem:[#allocation3 + $0x78] sm:$0xff]
      %v867 = vld [vmem:[#allocation3 + $0x80] sm:$0xff]
      %v868 = vld [vmem:[#allocation3 + $0x88] sm:$0xff]
      %v869 = vld [vmem:[#allocation3 + $0x90] sm:$0xff]
      %v870 = vld [vmem:[#allocation3 + $0x98] sm:$0xff]
      %vm871 = vcmask 654336
      %v873 = vsel %vm871, %v850, 0
      %875 = vmatprep.subr.mxu0 %v852
      %876 = vmatpush1.msra.mxu0 %v851
      %877 = vmatprep.subr.mxu0 %v854
      %878 = vmatpush1.msra.mxu0 %v853
      %879 = vmatprep.subr.mxu0 %v856
      %880 = vmatpush1.msra.mxu0 %v855
      %881 = vmatprep.subr.mxu0 %v858
      %882 = vmatpush1.msra.mxu0 %v857
      %883 = vmatprep.subr.mxu0 %v860
      %884 = vmatpush1.msra.mxu0 %v859
      %885 = vmatprep.subr.mxu0 %v862
      %886 = vmatpush1.msra.mxu0 %v861
      %887 = vmatprep.subr.mxu0 %v864
      %888 = vmatpush1.msra.mxu0 %v863
      %889 = vmatprep.subr.mxu0 %v866
      %890 = vmatpush1.msra.mxu0 %v865
      %891 = vmatprep.subr.mxu0 %v868
      %892 = vmatpush1.msra.mxu0 %v867
      %893 = vmatprep.subr.mxu0 %v870
      %894 = vmatpush1.msra.mxu0 %v869
      %895 = vmatprep.subr.mxu0 0.0
      %896 = vmatpush1.msra.mxu0 0.0
      %897 = vmatprep.subr.mxu0 0.0
      %898 = vmatpush1.msra.mxu0 0.0
      %899 = vmatprep.subr.mxu0 0.0
      %900 = vmatpush1.msra.mxu0 0.0
      %901 = vmatprep.subr.mxu0 0.0
      %902 = vmatpush1.msra.mxu0 0.0
      %903 = vmatprep.subr.mxu0 0.0
      %904 = vmatpush1.msra.mxu0 0.0
      %905 = vmatprep.subr.mxu0 0.0
      %906 = vmatpush1.msra.mxu0 0.0
      %907 = vmatprep.subr.mxu0 0.0
      %908 = vmatpush1.msra.mxu0 0.0
      %909 = vmatprep.subr.mxu0 0.0
      %910 = vmatpush1.msra.mxu0 0.0
      %911 = vmatprep.subr.mxu0 0.0
      %912 = vmatpush1.msra.mxu0 0.0
      %913 = vmatprep.subr.mxu0 0.0
      %914 = vmatpush1.msra.mxu0 0.0
      %915 = vmatprep.subr.mxu0 0.0
      %916 = vmatpush1.msra.mxu0 0.0
      %917 = vmatprep.subr.mxu0 0.0
      %918 = vmatpush1.msra.mxu0 0.0
      %919 = vmatprep.subr.mxu0 0.0
      %920 = vmatpush1.msra.mxu0 0.0
      %921 = vmatprep.subr.mxu0 0.0
      %922 = vmatpush1.msra.mxu0 0.0
      %923 = vmatprep.subr.mxu0 0.0
      %924 = vmatpush1.msra.mxu0 0.0
      %925 = vmatprep.subr.mxu0 0.0
      %926 = vmatpush1.msra.mxu0 0.0
      %927 = vmatprep.subr.mxu0 0.0
      %928 = vmatpush1.msra.mxu0 0.0
      %929 = vmatprep.subr.mxu0 0.0
      %930 = vmatpush1.msra.mxu0 0.0
      %931 = vmatprep.subr.mxu0 0.0
      %932 = vmatpush1.msra.mxu0 0.0
      %933 = vmatprep.subr.mxu0 0.0
      %934 = vmatpush1.msra.mxu0 0.0
      %935 = vmatprep.subr.mxu0 0.0
      %936 = vmatpush1.msra.mxu0 0.0
      %937 = vmatprep.subr.mxu0 0.0
      %938 = vmatpush1.msra.mxu0 0.0
      %939 = vmatprep.mubr.f32.mxu0 0.0
      %940 = vmatmul.mubr.f32.gmra.mrb[0].mxu0 %v873
      %v941 = vpop.f32.mrb[0].mxu0
      %v942 = vadd.f32 0.0, %v941
      %v943 = vpop.f32.mrb[0].mxu0
      %v944 = vadd.f32 0.0, %v943
      %945 = vdwg.mxu0
      %v946 = vtanh.pop %v942
      %v947 = vtanh.pop %v944
      %948 = vst [vmem:[%s403] sm:$0xff] %v946
      %949 = vst [vmem:[%s403 + $0x8] sm:$0xff] %v947
      %950 = vrot.lane.b32.xlu0 %v946, 17
      %v951 = vpop.permute.xlu0 %950
      %952 = vrot.lane.b32.xlu0 %v947, 17
      %v953 = vpop.permute.xlu0 %952
      %v954 = vsel %vm432, %v951, %v953
      %v955 = vsel %vm432, %v953, %v951
      %v956 = vmul.f32 %v955, %v438
      %v957 = vmul.f32 %v954, %v442
      %958 = vst [vmem:[#allocation2] sm:$0xff] %v956
      %959 = vst [vmem:[#allocation2 + $0x8] sm:$0xff] %v957
      %960 = vrot.lane.b32.xlu0 %v946, 16
      %v961 = vpop.permute.xlu0 %960
      %962 = vrot.lane.b32.xlu0 %v947, 16
      %v963 = vpop.permute.xlu0 %962
      %v964 = vsel %vm451, %v961, %v963
      %v965 = vsel %vm451, %v963, %v961
      %v966 = vmul.f32 %v965, %v457
      %v967 = vmul.f32 %v964, %v461
      %968 = vst [vmem:[#allocation2 + $0x10] sm:$0xff] %v966
      %969 = vst [vmem:[#allocation2 + $0x18] sm:$0xff] %v967
      %970 = vrot.lane.b32.xlu0 %v946, 15
      %v971 = vpop.permute.xlu0 %970
      %972 = vrot.lane.b32.xlu0 %v947, 15
      %v973 = vpop.permute.xlu0 %972
      %v974 = vsel %vm470, %v971, %v973
      %v975 = vsel %vm470, %v973, %v971
      %v976 = vmul.f32 %v975, %v476
      %v977 = vmul.f32 %v974, %v480
      %978 = vst [vmem:[#allocation2 + $0x20] sm:$0xff] %v976
      %979 = vst [vmem:[#allocation2 + $0x28] sm:$0xff] %v977
      %980 = vrot.lane.b32.xlu0 %v946, 1
      %v981 = vpop.permute.xlu0 %980
      %982 = vrot.lane.b32.xlu0 %v947, 1
      %v983 = vpop.permute.xlu0 %982
      %v984 = vsel %vm489, %v981, %v983
      %v985 = vsel %vm489, %v983, %v981
      %v986 = vmul.f32 %v985, %v495
      %v987 = vmul.f32 %v984, %v499
      %988 = vst [vmem:[#allocation2 + $0x30] sm:$0xff] %v986
      %989 = vst [vmem:[#allocation2 + $0x38] sm:$0xff] %v987
      %v990 = vmul.f32 %v946, %v507
      %v991 = vmul.f32 %v947, %v511
      %992 = vst [vmem:[#allocation2 + $0x40] sm:$0xff] %v990
      %993 = vst [vmem:[#allocation2 + $0x48] sm:$0xff] %v991
      %994 = vrot.lane.b32.xlu0 %v946, 127
      %v995 = vpop.permute.xlu0 %994
      %996 = vrot.lane.b32.xlu0 %v947, 127
      %v997 = vpop.permute.xlu0 %996
      %v998 = vsel %vm520, %v995, %v997
      %v999 = vsel %vm520, %v997, %v995
      %v1000 = vmul.f32 %v998, %v526
      %v1001 = vmul.f32 %v999, %v530
      %1002 = vst [vmem:[#allocation2 + $0x50] sm:$0xff] %v1000
      %1003 = vst [vmem:[#allocation2 + $0x58] sm:$0xff] %v1001
      %1004 = vrot.lane.b32.xlu0 %v946, 113
      %v1005 = vpop.permute.xlu0 %1004
      %1006 = vrot.lane.b32.xlu0 %v947, 113
      %v1007 = vpop.permute.xlu0 %1006
      %v1008 = vsel %vm539, %v1005, %v1007
      %v1009 = vsel %vm539, %v1007, %v1005
      %v1010 = vmul.f32 %v1008, %v545
      %v1011 = vmul.f32 %v1009, %v549
      %1012 = vst [vmem:[#allocation2 + $0x60] sm:$0xff] %v1010
      %1013 = vst [vmem:[#allocation2 + $0x68] sm:$0xff] %v1011
      %1014 = vrot.lane.b32.xlu0 %v946, 112
      %v1015 = vpop.permute.xlu0 %1014
      %1016 = vrot.lane.b32.xlu0 %v947, 112
      %v1017 = vpop.permute.xlu0 %1016
      %v1018 = vsel %vm558, %v1015, %v1017
      %v1019 = vsel %vm558, %v1017, %v1015
      %v1020 = vmul.f32 %v1018, %v564
      %v1021 = vmul.f32 %v1019, %v568
      %1022 = vst [vmem:[#allocation2 + $0x70] sm:$0xff] %v1020
      %1023 = vst [vmem:[#allocation2 + $0x78] sm:$0xff] %v1021
      %1024 = vrot.lane.b32.xlu0 %v946, 111
      %v1025 = vpop.permute.xlu0 %1024
      %1026 = vrot.lane.b32.xlu0 %v947, 111
      %v1027 = vpop.permute.xlu0 %1026
      %v1028 = vsel %vm577, %v1025, %v1027
      %v1029 = vsel %vm577, %v1027, %v1025
      %v1030 = vmul.f32 %v1028, %v583
      %v1031 = vmul.f32 %v1029, %v587
      %1032 = vst [vmem:[#allocation2 + $0x80] sm:$0xff] %v1030
      %1033 = vst [vmem:[#allocation2 + $0x88] sm:$0xff] %v1031
      %v1034 = vld [vmem:[%s6] sm:$0xff]
      %v1035 = vld [vmem:[#allocation2] sm:$0xff]
      %v1036 = vld [vmem:[#allocation2 + $0x8] sm:$0xff]
      %v1037 = vld [vmem:[#allocation2 + $0x10] sm:$0xff]
      %v1038 = vld [vmem:[#allocation2 + $0x18] sm:$0xff]
      %v1039 = vld [vmem:[#allocation2 + $0x20] sm:$0xff]
      %v1040 = vld [vmem:[#allocation2 + $0x28] sm:$0xff]
      %v1041 = vld [vmem:[#allocation2 + $0x30] sm:$0xff]
      %v1042 = vld [vmem:[#allocation2 + $0x38] sm:$0xff]
      %v1043 = vld [vmem:[#allocation2 + $0x40] sm:$0xff]
      %v1044 = vld [vmem:[#allocation2 + $0x48] sm:$0xff]
      %v1045 = vld [vmem:[#allocation2 + $0x50] sm:$0xff]
      %v1046 = vld [vmem:[#allocation2 + $0x58] sm:$0xff]
      %v1047 = vld [vmem:[#allocation2 + $0x60] sm:$0xff]
      %v1048 = vld [vmem:[#allocation2 + $0x68] sm:$0xff]
      %v1049 = vld [vmem:[#allocation2 + $0x70] sm:$0xff]
      %v1050 = vld [vmem:[#allocation2 + $0x78] sm:$0xff]
      %v1051 = vld [vmem:[#allocation2 + $0x80] sm:$0xff]
      %v1052 = vld [vmem:[#allocation2 + $0x88] sm:$0xff]
      %v1053 = vld [vmem:[%s398] sm:$0xff]
      %v1055 = vsel %vm612, %v1053, 0
      %1057 = vmatprep.subr.mxu0 %v416
      %1058 = vmatpush1.msra.mxu0 %v415
      %1059 = vmatprep.subr.mxu0 %v418
      %1060 = vmatpush1.msra.mxu0 %v417
      %1061 = vmatprep.subr.mxu0 0.0
      %1062 = vmatpush1.msra.mxu0 0.0
      %1063 = vmatprep.subr.mxu0 0.0
      %1064 = vmatpush1.msra.mxu0 0.0
      %1065 = vmatprep.subr.mxu0 0.0
      %1066 = vmatpush1.msra.mxu0 0.0
      %1067 = vmatprep.subr.mxu0 0.0
      %1068 = vmatpush1.msra.mxu0 0.0
      %1069 = vmatprep.subr.mxu0 0.0
      %1070 = vmatpush1.msra.mxu0 0.0
      %1071 = vmatprep.subr.mxu0 0.0
      %1072 = vmatpush1.msra.mxu0 0.0
      %1073 = vmatprep.subr.mxu0 0.0
      %1074 = vmatpush1.msra.mxu0 0.0
      %1075 = vmatprep.subr.mxu0 0.0
      %1076 = vmatpush1.msra.mxu0 0.0
      %1077 = vmatprep.subr.mxu0 0.0
      %1078 = vmatpush1.msra.mxu0 0.0
      %1079 = vmatprep.subr.mxu0 0.0
      %1080 = vmatpush1.msra.mxu0 0.0
      %1081 = vmatprep.subr.mxu0 0.0
      %1082 = vmatpush1.msra.mxu0 0.0
      %1083 = vmatprep.subr.mxu0 0.0
      %1084 = vmatpush1.msra.mxu0 0.0
      %1085 = vmatprep.subr.mxu0 0.0
      %1086 = vmatpush1.msra.mxu0 0.0
      %1087 = vmatprep.subr.mxu0 0.0
      %1088 = vmatpush1.msra.mxu0 0.0
      %1089 = vmatprep.subr.mxu0 0.0
      %1090 = vmatpush1.msra.mxu0 0.0
      %1091 = vmatprep.subr.mxu0 0.0
      %1092 = vmatpush1.msra.mxu0 0.0
      %1093 = vmatprep.subr.mxu0 0.0
      %1094 = vmatpush1.msra.mxu0 0.0
      %1095 = vmatprep.subr.mxu0 0.0
      %1096 = vmatpush1.msra.mxu0 0.0
      %1097 = vmatprep.subr.mxu0 0.0
      %1098 = vmatpush1.msra.mxu0 0.0
      %1099 = vmatprep.subr.mxu0 0.0
      %1100 = vmatpush1.msra.mxu0 0.0
      %1101 = vmatprep.subr.mxu0 0.0
      %1102 = vmatpush1.msra.mxu0 0.0
      %1103 = vmatprep.subr.mxu0 0.0
      %1104 = vmatpush1.msra.mxu0 0.0
      %1105 = vmatprep.subr.mxu0 0.0
      %1106 = vmatpush1.msra.mxu0 0.0
      %1107 = vmatprep.subr.mxu0 0.0
      %1108 = vmatpush1.msra.mxu0 0.0
      %1109 = vmatprep.subr.mxu0 0.0
      %1110 = vmatpush1.msra.mxu0 0.0
      %1111 = vmatprep.subr.mxu0 0.0
      %1112 = vmatpush1.msra.mxu0 0.0
      %1113 = vmatprep.subr.mxu0 0.0
      %1114 = vmatpush1.msra.mxu0 0.0
      %1115 = vmatprep.subr.mxu0 0.0
      %1116 = vmatpush1.msra.mxu0 0.0
      %1117 = vmatprep.subr.mxu0 0.0
      %1118 = vmatpush1.msra.mxu0 0.0
      %1119 = vmatprep.subr.mxu0 0.0
      %1120 = vmatpush1.msra.mxu0 0.0
      %1121 = vmatprep.mubr.f32.mxu0 0.0
      %1122 = vmatmul.mubr.f32.gmra.mrb[0].mxu0 %v1055
      %v1123 = vpop.f32.mrb[0].mxu0
      %v1124 = vadd.f32 0.0, %v1123
      %v1125 = vpop.f32.mrb[0].mxu0
      %v1126 = vadd.f32 0.0, %v1125
      %1127 = vdwg.mxu0
      %v1129 = vsel %vm687, %v1034, 0
      %1131 = vmatprep.subr.mxu0 %v1036
      %1132 = vmatpush1.msra.mxu0 %v1035
      %1133 = vmatprep.subr.mxu0 %v1038
      %1134 = vmatpush1.msra.mxu0 %v1037
      %1135 = vmatprep.subr.mxu0 %v1040
      %1136 = vmatpush1.msra.mxu0 %v1039
      %1137 = vmatprep.subr.mxu0 %v1042
      %1138 = vmatpush1.msra.mxu0 %v1041
      %1139 = vmatprep.subr.mxu0 %v1044
      %1140 = vmatpush1.msra.mxu0 %v1043
      %1141 = vmatprep.subr.mxu0 %v1046
      %1142 = vmatpush1.msra.mxu0 %v1045
      %1143 = vmatprep.subr.mxu0 %v1048
      %1144 = vmatpush1.msra.mxu0 %v1047
      %1145 = vmatprep.subr.mxu0 %v1050
      %1146 = vmatpush1.msra.mxu0 %v1049
      %1147 = vmatprep.subr.mxu0 %v1052
      %1148 = vmatpush1.msra.mxu0 %v1051
      %1149 = vmatprep.subr.mxu0 0.0
      %1150 = vmatpush1.msra.mxu0 0.0
      %1151 = vmatprep.subr.mxu0 0.0
      %1152 = vmatpush1.msra.mxu0 0.0
      %1153 = vmatprep.subr.mxu0 0.0
      %1154 = vmatpush1.msra.mxu0 0.0
      %1155 = vmatprep.subr.mxu0 0.0
      %1156 = vmatpush1.msra.mxu0 0.0
      %1157 = vmatprep.subr.mxu0 0.0
      %1158 = vmatpush1.msra.mxu0 0.0
      %1159 = vmatprep.subr.mxu0 0.0
      %1160 = vmatpush1.msra.mxu0 0.0
      %1161 = vmatprep.subr.mxu0 0.0
      %1162 = vmatpush1.msra.mxu0 0.0
      %1163 = vmatprep.subr.mxu0 0.0
      %1164 = vmatpush1.msra.mxu0 0.0
      %1165 = vmatprep.subr.mxu0 0.0
      %1166 = vmatpush1.msra.mxu0 0.0
      %1167 = vmatprep.subr.mxu0 0.0
      %1168 = vmatpush1.msra.mxu0 0.0
      %1169 = vmatprep.subr.mxu0 0.0
      %1170 = vmatpush1.msra.mxu0 0.0
      %1171 = vmatprep.subr.mxu0 0.0
      %1172 = vmatpush1.msra.mxu0 0.0
      %1173 = vmatprep.subr.mxu0 0.0
      %1174 = vmatpush1.msra.mxu0 0.0
      %1175 = vmatprep.subr.mxu0 0.0
      %1176 = vmatpush1.msra.mxu0 0.0
      %1177 = vmatprep.subr.mxu0 0.0
      %1178 = vmatpush1.msra.mxu0 0.0
      %1179 = vmatprep.subr.mxu0 0.0
      %1180 = vmatpush1.msra.mxu0 0.0
      %1181 = vmatprep.subr.mxu0 0.0
      %1182 = vmatpush1.msra.mxu0 0.0
      %1183 = vmatprep.subr.mxu0 0.0
      %1184 = vmatpush1.msra.mxu0 0.0
      %1185 = vmatprep.subr.mxu0 0.0
      %1186 = vmatpush1.msra.mxu0 0.0
      %1187 = vmatprep.subr.mxu0 0.0
      %1188 = vmatpush1.msra.mxu0 0.0
      %1189 = vmatprep.subr.mxu0 0.0
      %1190 = vmatpush1.msra.mxu0 0.0
      %1191 = vmatprep.subr.mxu0 0.0
      %1192 = vmatpush1.msra.mxu0 0.0
      %1193 = vmatprep.subr.mxu0 0.0
      %1194 = vmatpush1.msra.mxu0 0.0
      %1195 = vmatprep.mubr.f32.mxu0 0.0
      %1196 = vmatmul.mubr.f32.gmra.mrb[0].mxu0 %v1129
      %v1197 = vpop.f32.mrb[0].mxu0
      %v1198 = vadd.f32 %v1124, %v1197
      %v1199 = vpop.f32.mrb[0].mxu0
      %v1200 = vadd.f32 %v1126, %v1199
      %1201 = vdwg.mxu0
      %v1202 = vmax.f32 %v1198, 0.0
      %v1203 = vmax.f32 %v1200, 0.0
      %1204 = vrot.lane.b32.xlu0 %v1202, 17
      %v1205 = vpop.permute.xlu0 %1204
      %1206 = vrot.lane.b32.xlu0 %v1203, 17
      %v1207 = vpop.permute.xlu0 %1206
      %v1208 = vsel %vm432, %v1205, %v1207
      %v1209 = vsel %vm432, %v1207, %v1205
      %v1210 = vmul.f32 %v1209, %v438
      %v1211 = vmul.f32 %v1208, %v442
      %1212 = vst [vmem:[#allocation3] sm:$0xff] %v1210
      %1213 = vst [vmem:[#allocation3 + $0x8] sm:$0xff] %v1211
      %1214 = vrot.lane.b32.xlu0 %v1202, 16
      %v1215 = vpop.permute.xlu0 %1214
      %1216 = vrot.lane.b32.xlu0 %v1203, 16
      %v1217 = vpop.permute.xlu0 %1216
      %v1218 = vsel %vm451, %v1215, %v1217
      %v1219 = vsel %vm451, %v1217, %v1215
      %v1220 = vmul.f32 %v1219, %v457
      %v1221 = vmul.f32 %v1218, %v461
      %1222 = vst [vmem:[#allocation3 + $0x10] sm:$0xff] %v1220
      %1223 = vst [vmem:[#allocation3 + $0x18] sm:$0xff] %v1221
      %1224 = vrot.lane.b32.xlu0 %v1202, 15
      %v1225 = vpop.permute.xlu0 %1224
      %1226 = vrot.lane.b32.xlu0 %v1203, 15
      %v1227 = vpop.permute.xlu0 %1226
      %v1228 = vsel %vm470, %v1225, %v1227
      %v1229 = vsel %vm470, %v1227, %v1225
      %v1230 = vmul.f32 %v1229, %v476
      %v1231 = vmul.f32 %v1228, %v480
      %1232 = vst [vmem:[#allocation3 + $0x20] sm:$0xff] %v1230
      %1233 = vst [vmem:[#allocation3 + $0x28] sm:$0xff] %v1231
      %1234 = vrot.lane.b32.xlu0 %v1202, 1
      %v1235 = vpop.permute.xlu0 %1234
      %1236 = vrot.lane.b32.xlu0 %v1203, 1
      %v1237 = vpop.permute.xlu0 %1236
      %v1238 = vsel %vm489, %v1235, %v1237
      %v1239 = vsel %vm489, %v1237, %v1235
      %v1240 = vmul.f32 %v1239, %v495
      %v1241 = vmul.f32 %v1238, %v499
      %1242 = vst [vmem:[#allocation3 + $0x30] sm:$0xff] %v1240
      %1243 = vst [vmem:[#allocation3 + $0x38] sm:$0xff] %v1241
      %v1244 = vmul.f32 %v1202, %v507
      %v1245 = vmul.f32 %v1203, %v511
      %1246 = vst [vmem:[#allocation3 + $0x40] sm:$0xff] %v1244
      %1247 = vst [vmem:[#allocation3 + $0x48] sm:$0xff] %v1245
      %1248 = vrot.lane.b32.xlu0 %v1202, 127
      %v1249 = vpop.permute.xlu0 %1248
      %1250 = vrot.lane.b32.xlu0 %v1203, 127
      %v1251 = vpop.permute.xlu0 %1250
      %v1252 = vsel %vm520, %v1249, %v1251
      %v1253 = vsel %vm520, %v1251, %v1249
      %v1254 = vmul.f32 %v1252, %v526
      %v1255 = vmul.f32 %v1253, %v530
      %1256 = vst [vmem:[#allocation3 + $0x50] sm:$0xff] %v1254
      %1257 = vst [vmem:[#allocation3 + $0x58] sm:$0xff] %v1255
      %1258 = vrot.lane.b32.xlu0 %v1202, 113
      %v1259 = vpop.permute.xlu0 %1258
      %1260 = vrot.lane.b32.xlu0 %v1203, 113
      %v1261 = vpop.permute.xlu0 %1260
      %v1262 = vsel %vm539, %v1259, %v1261
      %v1263 = vsel %vm539, %v1261, %v1259
      %v1264 = vmul.f32 %v1262, %v545
      %v1265 = vmul.f32 %v1263, %v549
      %1266 = vst [vmem:[#allocation3 + $0x60] sm:$0xff] %v1264
      %1267 = vst [vmem:[#allocation3 + $0x68] sm:$0xff] %v1265
      %1268 = vrot.lane.b32.xlu0 %v1202, 112
      %v1269 = vpop.permute.xlu0 %1268
      %1270 = vrot.lane.b32.xlu0 %v1203, 112
      %v1271 = vpop.permute.xlu0 %1270
      %v1272 = vsel %vm558, %v1269, %v1271
      %v1273 = vsel %vm558, %v1271, %v1269
      %v1274 = vmul.f32 %v1272, %v564
      %v1275 = vmul.f32 %v1273, %v568
      %1276 = vst [vmem:[#allocation3 + $0x70] sm:$0xff] %v1274
      %1277 = vst [vmem:[#allocation3 + $0x78] sm:$0xff] %v1275
      %1278 = vrot.lane.b32.xlu0 %v1202, 111
      %v1279 = vpop.permute.xlu0 %1278
      %1280 = vrot.lane.b32.xlu0 %v1203, 111
      %v1281 = vpop.permute.xlu0 %1280
      %v1282 = vsel %vm577, %v1279, %v1281
      %v1283 = vsel %vm577, %v1281, %v1279
      %v1284 = vmul.f32 %v1282, %v583
      %v1285 = vmul.f32 %v1283, %v587
      %1286 = vst [vmem:[#allocation3 + $0x80] sm:$0xff] %v1284
      %1287 = vst [vmem:[#allocation3 + $0x88] sm:$0xff] %v1285
      %1288 = vst [vmem:[#allocation3 + $0x90] sm:$0xff] %v423
      %1289 = vst [vmem:[#allocation3 + $0x98] sm:$0xff] %v423
      %v1290 = vld [vmem:[%s8] sm:$0xff]
      %v1291 = vld [vmem:[#allocation3] sm:$0xff]
      %v1292 = vld [vmem:[#allocation3 + $0x8] sm:$0xff]
      %v1293 = vld [vmem:[#allocation3 + $0x10] sm:$0xff]
      %v1294 = vld [vmem:[#allocation3 + $0x18] sm:$0xff]
      %v1295 = vld [vmem:[#allocation3 + $0x20] sm:$0xff]
      %v1296 = vld [vmem:[#allocation3 + $0x28] sm:$0xff]
      %v1297 = vld [vmem:[#allocation3 + $0x30] sm:$0xff]
      %v1298 = vld [vmem:[#allocation3 + $0x38] sm:$0xff]
      %v1299 = vld [vmem:[#allocation3 + $0x40] sm:$0xff]
      %v1300 = vld [vmem:[#allocation3 + $0x48] sm:$0xff]
      %v1301 = vld [vmem:[#allocation3 + $0x50] sm:$0xff]
      %v1302 = vld [vmem:[#allocation3 + $0x58] sm:$0xff]
      %v1303 = vld [vmem:[#allocation3 + $0x60] sm:$0xff]
      %v1304 = vld [vmem:[#allocation3 + $0x68] sm:$0xff]
      %v1305 = vld [vmem:[#allocation3 + $0x70] sm:$0xff]
      %v1306 = vld [vmem:[#allocation3 + $0x78] sm:$0xff]
      %v1307 = vld [vmem:[#allocation3 + $0x80] sm:$0xff]
      %v1308 = vld [vmem:[#allocation3 + $0x88] sm:$0xff]
      %v1309 = vld [vmem:[#allocation3 + $0x90] sm:$0xff]
      %v1310 = vld [vmem:[#allocation3 + $0x98] sm:$0xff]
      %v1312 = vsel %vm871, %v1290, 0
      %1314 = vmatprep.subr.mxu0 %v1292
      %1315 = vmatpush1.msra.mxu0 %v1291
      %1316 = vmatprep.subr.mxu0 %v1294
      %1317 = vmatpush1.msra.mxu0 %v1293
      %1318 = vmatprep.subr.mxu0 %v1296
      %1319 = vmatpush1.msra.mxu0 %v1295
      %1320 = vmatprep.subr.mxu0 %v1298
      %1321 = vmatpush1.msra.mxu0 %v1297
      %1322 = vmatprep.subr.mxu0 %v1300
      %1323 = vmatpush1.msra.mxu0 %v1299
      %1324 = vmatprep.subr.mxu0 %v1302
      %1325 = vmatpush1.msra.mxu0 %v1301
      %1326 = vmatprep.subr.mxu0 %v1304
      %1327 = vmatpush1.msra.mxu0 %v1303
      %1328 = vmatprep.subr.mxu0 %v1306
      %1329 = vmatpush1.msra.mxu0 %v1305
      %1330 = vmatprep.subr.mxu0 %v1308
      %1331 = vmatpush1.msra.mxu0 %v1307
      %1332 = vmatprep.subr.mxu0 %v1310
      %1333 = vmatpush1.msra.mxu0 %v1309
      %1334 = vmatprep.subr.mxu0 0.0
      %1335 = vmatpush1.msra.mxu0 0.0
      %1336 = vmatprep.subr.mxu0 0.0
      %1337 = vmatpush1.msra.mxu0 0.0
      %1338 = vmatprep.subr.mxu0 0.0
      %1339 = vmatpush1.msra.mxu0 0.0
      %1340 = vmatprep.subr.mxu0 0.0
      %1341 = vmatpush1.msra.mxu0 0.0
      %1342 = vmatprep.subr.mxu0 0.0
      %1343 = vmatpush1.msra.mxu0 0.0
      %1344 = vmatprep.subr.mxu0 0.0
      %1345 = vmatpush1.msra.mxu0 0.0
      %1346 = vmatprep.subr.mxu0 0.0
      %1347 = vmatpush1.msra.mxu0 0.0
      %1348 = vmatprep.subr.mxu0 0.0
      %1349 = vmatpush1.msra.mxu0 0.0
      %1350 = vmatprep.subr.mxu0 0.0
      %1351 = vmatpush1.msra.mxu0 0.0
      %1352 = vmatprep.subr.mxu0 0.0
      %1353 = vmatpush1.msra.mxu0 0.0
      %1354 = vmatprep.subr.mxu0 0.0
      %1355 = vmatpush1.msra.mxu0 0.0
      %1356 = vmatprep.subr.mxu0 0.0
      %1357 = vmatpush1.msra.mxu0 0.0
      %1358 = vmatprep.subr.mxu0 0.0
      %1359 = vmatpush1.msra.mxu0 0.0
      %1360 = vmatprep.subr.mxu0 0.0
      %1361 = vmatpush1.msra.mxu0 0.0
      %1362 = vmatprep.subr.mxu0 0.0
      %1363 = vmatpush1.msra.mxu0 0.0
      %1364 = vmatprep.subr.mxu0 0.0
      %1365 = vmatpush1.msra.mxu0 0.0
      %1366 = vmatprep.subr.mxu0 0.0
      %1367 = vmatpush1.msra.mxu0 0.0
      %1368 = vmatprep.subr.mxu0 0.0
      %1369 = vmatpush1.msra.mxu0 0.0
      %1370 = vmatprep.subr.mxu0 0.0
      %1371 = vmatpush1.msra.mxu0 0.0
      %1372 = vmatprep.subr.mxu0 0.0
      %1373 = vmatpush1.msra.mxu0 0.0
      %1374 = vmatprep.subr.mxu0 0.0
      %1375 = vmatpush1.msra.mxu0 0.0
      %1376 = vmatprep.subr.mxu0 0.0
      %1377 = vmatpush1.msra.mxu0 0.0
      %1378 = vmatprep.mubr.f32.mxu0 0.0
      %1379 = vmatmul.mubr.f32.gmra.mrb[0].mxu0 %v1312
      %v1380 = vpop.f32.mrb[0].mxu0
      %v1381 = vadd.f32 0.0, %v1380
      %v1382 = vpop.f32.mrb[0].mxu0
      %v1383 = vadd.f32 0.0, %v1382
      %1384 = vdwg.mxu0
      %v1385 = vtanh.pop %v1381
      %v1386 = vtanh.pop %v1383
      %1387 = vst [vmem:[%s409] sm:$0xff] %v1385
      %1388 = vst [vmem:[%s409 + $0x8] sm:$0xff] %v1386
      %s1389 = smul.u32 2, %s22
      %p1390 = scmp.lt.s32.totalorder %s1389, 3
      %s1391 = scalar_select %p1390, %s1389, 3
      %s1392 = smul.addr %s1391, 8
      %s1393 = scalar_lea.vmem %s9, %s1392
      %s1394 = smul.u32 2, %s22
      %p1395 = scmp.lt.s32.totalorder %s1394, 3
      %s1396 = scalar_select %p1395, %s1394, 3
      %s1397 = smul.addr %s1396, 8
      %s1398 = scalar_lea.vmem %s10, %s1397
      // Predicated region
      $region57: #{art_editing_test_forward.1} parent=55 // pred_check
        %p1399 = pneg %p244
      $region58: #{art_editing_test_forward.1} parent=55 // pred_check_branch
        %1401 = sbr.rel (%p1399) target = $region60
      $region59: #{art_editing_test_forward.1} parent=55 // pred_region
        %s1402 = smul.u32 2, %s22
      $region60: #{art_editing_test_forward.1} parent=55 // pred_fallthru
        _
      // Predicated region
      $region61: #{art_editing_test_forward.1} parent=55 // pred_check
        %p1403 = pneg %p270
      $region62: #{art_editing_test_forward.1} parent=55 // pred_check_branch
        %1405 = sbr.rel (%p1403) target = $region64
      $region63: #{art_editing_test_forward.1} parent=55 // pred_region
        %s1406 = smul.u32 2, %s22
      $region64: #{art_editing_test_forward.1} parent=55 // pred_fallthru
        _
    $region56: #{art_editing_test_forward.1} parent=5 // pred_fallthru
      _
    %p1407 = scmp.le.s32.totalorder 2, %s17
    // Predicated region
    $region65: #{art_editing_test_forward.1} parent=5 // pred_check
      %p1408 = pneg %p1407
    $region66: #{art_editing_test_forward.1} parent=5 // pred_check_branch
      %1410 = sbr.rel (%p1408) target = $region68
    $region67: #{art_editing_test_forward.1} parent=5 // pred_region
      %s1411 = ssub.s32 %s17, 2
      // Predicated region
      $region69: #{art_editing_test_forward.1} parent=67 // pred_check
        %p1412 = pneg %p250
      $region70: #{art_editing_test_forward.1} parent=67 // pred_check_branch
        %1414 = sbr.rel (%p1412) target = $region72
      $region71: #{art_editing_test_forward.1} parent=67 // pred_region
        %s1415 = smul.u32 2, %s23
        %p1416 = scmp.lt.s32.totalorder %s1415, 3
        %s1417 = scalar_select %p1416, %s1415, 3
        %s1418 = smul.addr %s1417, 8
        %s1419 = scalar_lea.vmem %s9, %s1418
      $region72: #{art_editing_test_forward.1} parent=67 // pred_fallthru
        _
      // Predicated region
      $region73: #{art_editing_test_forward.1} parent=67 // pred_check
        %p1420 = pneg %p276
      $region74: #{art_editing_test_forward.1} parent=67 // pred_check_branch
        %1422 = sbr.rel (%p1420) target = $region76
      $region75: #{art_editing_test_forward.1} parent=67 // pred_region
        %s1423 = smul.u32 2, %s23
        %p1424 = scmp.lt.s32.totalorder %s1423, 3
        %s1425 = scalar_select %p1424, %s1423, 3
        %s1426 = smul.addr %s1425, 8
        %s1427 = scalar_lea.vmem %s10, %s1426
      $region76: #{art_editing_test_forward.1} parent=67 // pred_fallthru
        _
    $region68: #{art_editing_test_forward.1} parent=5 // pred_fallthru
      _
  $region6: #{art_editing_test_forward.1} parent=0 // loop_footer
    %s21 = sadd.s32 1, %s17
  $region7: #{art_editing_test_forward.1} parent=0 // loop_footer_branch
    %16 = sbr.rel target = $region3
  $region8: #{art_editing_test_forward.1} parent=0 // loop_exit
    _

</llo_original>
